<compile_context>
chip_gen: v6e
topology: v6e:2x2x1
jax: 0.10.0
libtpu: 0.0.40
codegen_flags: <defaults>
</compile_context>

<pallas_src>
import functools

import jax
import jax.numpy as jnp
import numpy as np
from jax import lax
from jax.experimental import pallas as pl
from jax.experimental.pallas import tpu as pltpu


# ----------------------------------------------------------------------------
# Fused kernel: QKV projection + per-head attention + fc + residual + LayerNorm
# ----------------------------------------------------------------------------
def _mha_fused_kernel(q_ref, k_ref, v_ref,
                      wq_ref, wk_ref, wv_ref,
                      bq_ref, bk_ref, bv_ref,
                      wfc_ref, bfc_ref, g_ref, beta_ref,
                      o_ref, attn_ref,
                      *, n_head, d_k, d_v, inv_temperature, compute_dtype):
    cd = compute_dtype
    f32 = jnp.float32

    q = q_ref[0]                       # (Lq, d_model)  -- also the residual
    k = k_ref[0]                       # (Lk, d_model)
    v = v_ref[0]                       # (Lv, d_model)

    # Full-width projections: one MXU matmul each with N = n_head*d_{k,v}
    # (fills the 128/256-wide MXU instead of H narrow per-head matmuls).
    qh = jnp.dot(q.astype(cd), wq_ref[...].astype(cd),
                 preferred_element_type=f32) + bq_ref[...]         # (Lq, H*d_k)
    kh = jnp.dot(k.astype(cd), wk_ref[...].astype(cd),
                 preferred_element_type=f32) + bk_ref[...]         # (Lk, H*d_k)
    vh = jnp.dot(v.astype(cd), wv_ref[...].astype(cd),
                 preferred_element_type=f32) + bv_ref[...]         # (Lv, H*d_v)

    wfc = wfc_ref[...].astype(cd)                                  # (H*d_v, d_model)

    # Accumulate fc(ctx) head-by-head (fc is linear => sum of per-head partials),
    # seeded with fc bias + residual.  No ctx writeback, no second kernel.
    x = q.astype(f32) + bfc_ref[...]                               # (Lq, d_model)

    for h in range(n_head):            # n_head is a compile-time constant
        q_h = qh[:, h * d_k:(h + 1) * d_k]
        k_h = kh[:, h * d_k:(h + 1) * d_k]
        v_h = vh[:, h * d_v:(h + 1) * d_v]

        # scores: contract directly on d_k (no materialized k_h.T transpose)
        s = lax.dot_general(q_h.astype(cd), k_h.astype(cd),
                            (((1,), (1,)), ((), ())),
                            preferred_element_type=f32) * inv_temperature
        s = s - jnp.max(s, axis=-1, keepdims=True)
        p = jnp.exp(s)
        p = p * pl.reciprocal(jnp.sum(p, axis=-1, keepdims=True), approx=True)

        attn_ref[h, 0] = p.astype(attn_ref.dtype)                  # (Lq, Lk)

        ctx = jnp.dot(p.astype(cd), v_h.astype(cd),
                      preferred_element_type=f32)                  # (Lq, d_v)
        x = x + jnp.dot(ctx.astype(cd), wfc[h * d_v:(h + 1) * d_v, :],
                        preferred_element_type=f32)                # (Lq, d_model)

    # LayerNorm(d_model): biased variance, eps=1e-5 inside rsqrt (PyTorch).
    mu = jnp.mean(x, axis=-1, keepdims=True)
    var = jnp.mean((x - mu) ** 2, axis=-1, keepdims=True)
    y = (x - mu) * lax.rsqrt(var + 1e-5)
    o_ref[0] = (y * g_ref[...] + beta_ref[...]).astype(o_ref.dtype)


# ----------------------------------------------------------------------------
# One-time parameter re-layout (do NOT redo per forward call)
# ----------------------------------------------------------------------------
def prepare_params(params, *, n_head, d_k, d_v):
    d_model = params["fc_w"].shape[0]
    return {
        # torch Linear: y = x @ W^T + b, W is (out, in)  ->  store W^T once.
        "wq": jnp.asarray(params["w_qs_w"]).T,                  # (d_model, H*d_k)
        "wk": jnp.asarray(params["w_ks_w"]).T,
        "wv": jnp.asarray(params["w_vs_w"]).T,                  # (d_model, H*d_v)
        "bq": params["w_qs_b"].reshape(1, n_head * d_k),
        "bk": params["w_ks_b"].reshape(1, n_head * d_k),
        "bv": params["w_vs_b"].reshape(1, n_head * d_v),
        "wfc": jnp.asarray(params["fc_w"]).T,                   # (H*d_v, d_model)
        "bfc": params["fc_b"].reshape(1, d_model),
        "gamma": params["ln_g"].reshape(1, d_model),
        "beta": params["ln_b"].reshape(1, d_model),
    }


# ----------------------------------------------------------------------------
# Wrapper
# ----------------------------------------------------------------------------
def multi_head_attention(q, k, v, prepared, *, n_head, d_k, d_v,
                         compute_dtype=jnp.float32,
                         attn_dtype=jnp.float32):
    """q, k, v: (B, L, d_model) float32. Returns (output, attn)."""
    B, Lq, d_model = q.shape
    _, Lk, _ = k.shape
    _, Lv, _ = v.shape
    inv_temperature = float(1.0 / np.power(d_k, 0.5))

    kernel = functools.partial(
        _mha_fused_kernel, n_head=n_head, d_k=d_k, d_v=d_v,
        inv_temperature=inv_temperature, compute_dtype=compute_dtype)

    out, attn = pl.pallas_call(
        kernel,
        out_shape=(
            jax.ShapeDtypeStruct((B, Lq, d_model), q.dtype),
            jax.ShapeDtypeStruct((n_head, B, Lq, Lk), attn_dtype),
        ),
        grid=(B,),
        in_specs=[
            pl.BlockSpec((1, Lq, d_model), lambda b: (b, 0, 0)),
            pl.BlockSpec((1, Lk, d_model), lambda b: (b, 0, 0)),
            pl.BlockSpec((1, Lv, d_model), lambda b: (b, 0, 0)),
            pl.BlockSpec((d_model, n_head * d_k), lambda b: (0, 0)),
            pl.BlockSpec((d_model, n_head * d_k), lambda b: (0, 0)),
            pl.BlockSpec((d_model, n_head * d_v), lambda b: (0, 0)),
            pl.BlockSpec((1, n_head * d_k), lambda b: (0, 0)),
            pl.BlockSpec((1, n_head * d_k), lambda b: (0, 0)),
            pl.BlockSpec((1, n_head * d_v), lambda b: (0, 0)),
            pl.BlockSpec((n_head * d_v, d_model), lambda b: (0, 0)),
            pl.BlockSpec((1, d_model), lambda b: (0, 0)),
            pl.BlockSpec((1, d_model), lambda b: (0, 0)),
            pl.BlockSpec((1, d_model), lambda b: (0, 0)),
        ],
        out_specs=(
            pl.BlockSpec((1, Lq, d_model), lambda b: (b, 0, 0)),
            pl.BlockSpec((n_head, 1, Lq, Lk), lambda b: (0, b, 0, 0)),
        ),
        compiler_params=pltpu.CompilerParams(
            dimension_semantics=("parallel",)),
    )(q, k, v,
      prepared["wq"], prepared["wk"], prepared["wv"],
      prepared["bq"], prepared["bk"], prepared["bv"],
      prepared["wfc"], prepared["bfc"], prepared["gamma"], prepared["beta"])

    # torch returns attn as (n_head*B, len_q, len_k), head-major -> free reshape.
    return out, attn.reshape(n_head * B, Lq, Lk)


# ----------------------------------------------------------------------------
# Init (matches the PyTorch module's initializers) + pure-JAX reference
# ----------------------------------------------------------------------------
def init_params(key, n_head, d_model, d_k, d_v):
    ks = jax.random.split(key, 8)
    std_qk = np.sqrt(2.0 / (d_model + d_k))
    std_v = np.sqrt(2.0 / (d_model + d_v))
    std_fc = np.sqrt(2.0 / (n_head * d_v + d_model))
    lin_bound = 1.0 / np.sqrt(d_model)
    fc_bound = 1.0 / np.sqrt(n_head * d_v)
    return {
        "w_qs_w": std_qk * jax.random.normal(ks[0], (n_head * d_k, d_model), jnp.float32),
        "w_ks_w": std_qk * jax.random.normal(ks[1], (n_head * d_k, d_model), jnp.float32),
        "w_vs_w": std_v * jax.random.normal(ks[2], (n_head * d_v, d_model), jnp.float32),
        "w_qs_b": jax.random.uniform(ks[3], (n_head * d_k,), jnp.float32, -lin_bound, lin_bound),
        "w_ks_b": jax.random.uniform(ks[4], (n_head * d_k,), jnp.float32, -lin_bound, lin_bound),
        "w_vs_b": jax.random.uniform(ks[5], (n_head * d_v,), jnp.float32, -lin_bound, lin_bound),
        "fc_w": std_fc * jax.random.normal(ks[6], (d_model, n_head * d_v), jnp.float32),
        "fc_b": jax.random.uniform(ks[7], (d_model,), jnp.float32, -fc_bound, fc_bound),
        "ln_g": jnp.ones((d_model,), jnp.float32),
        "ln_b": jnp.zeros((d_model,), jnp.float32),
    }


def _reference(q, k, v, params, *, n_head, d_k, d_v):
    B, Lq, d_model = q.shape
    Lk = k.shape[1]
    qh = q @ params["w_qs_w"].T + params["w_qs_b"]
    kh = k @ params["w_ks_w"].T + params["w_ks_b"]
    vh = v @ params["w_vs_w"].T + params["w_vs_b"]
    qh = qh.reshape(B, Lq, n_head, d_k).transpose(2, 0, 1, 3).reshape(-1, Lq, d_k)
    kh = kh.reshape(B, Lk, n_head, d_k).transpose(2, 0, 1, 3).reshape(-1, Lk, d_k)
    vh = vh.reshape(B, Lk, n_head, d_v).transpose(2, 0, 1, 3).reshape(-1, Lk, d_v)
    s = jnp.einsum("bqd,bkd->bqk", qh, kh) / np.sqrt(d_k)
    attn = jax.nn.softmax(s, axis=-1)
    ctx = jnp.einsum("bqk,bkd->bqd", attn, vh)
    ctx = ctx.reshape(n_head, B, Lq, d_v).transpose(1, 2, 0, 3).reshape(B, Lq, n_head * d_v)
    x = ctx @ params["fc_w"].T + params["fc_b"] + q
    mu = x.mean(-1, keepdims=True)
    var = ((x - mu) ** 2).mean(-1, keepdims=True)
    out = (x - mu) / jnp.sqrt(var + 1e-5) * params["ln_g"] + params["ln_b"]
    return out, attn


if __name__ == "__main__":
    B, L, d_model = 2, 8, 32
    n_head, d_k, d_v = 2, 16, 16

    key = jax.random.PRNGKey(0)
    kq, kk, kv, kp = jax.random.split(key, 4)
    q = jax.random.normal(kq, (B, L, d_model), jnp.float32)
    k = jax.random.normal(kk, (B, L, d_model), jnp.float32)
    v = jax.random.normal(kv, (B, L, d_model), jnp.float32)
    params = init_params(kp, n_head, d_model, d_k, d_v)
    prepared = prepare_params(params, n_head=n_head, d_k=d_k, d_v=d_v)

    out, attn = multi_head_attention(q, k, v, prepared,
                                     n_head=n_head, d_k=d_k, d_v=d_v)
    jax.block_until_ready((out, attn))
    assert out.shape == (B, L, d_model)
    assert attn.shape == (n_head * B, L, L)

    ref_out, ref_attn = _reference(q, k, v, params, n_head=n_head, d_k=d_k, d_v=d_v)
    assert jnp.allclose(out, ref_out, atol=1e-2, rtol=1e-2)
    assert jnp.allclose(attn, ref_attn, atol=1e-2, rtol=1e-2)
    print("KERNEL_OK")
</pallas_src>

<mosaic_0001>
module attributes {stable_mosaic.version = 11 : i64} {
  func.func @_mha_fused_kernel(%arg0: i32, %arg1: memref<1x8x32xf32, #tpu.memory_space<vmem>>, %arg2: memref<1x8x32xf32, #tpu.memory_space<vmem>>, %arg3: memref<1x8x32xf32, #tpu.memory_space<vmem>>, %arg4: memref<32x32xf32, #tpu.memory_space<vmem>>, %arg5: memref<32x32xf32, #tpu.memory_space<vmem>>, %arg6: memref<32x32xf32, #tpu.memory_space<vmem>>, %arg7: memref<1x32xf32, #tpu.memory_space<vmem>>, %arg8: memref<1x32xf32, #tpu.memory_space<vmem>>, %arg9: memref<1x32xf32, #tpu.memory_space<vmem>>, %arg10: memref<32x32xf32, #tpu.memory_space<vmem>>, %arg11: memref<1x32xf32, #tpu.memory_space<vmem>>, %arg12: memref<1x32xf32, #tpu.memory_space<vmem>>, %arg13: memref<1x32xf32, #tpu.memory_space<vmem>>, %arg14: memref<1x8x32xf32, #tpu.memory_space<vmem>>, %arg15: memref<2x1x8x8xf32, #tpu.memory_space<vmem>>) attributes {dimension_semantics = [#tpu.dimension_semantics<parallel>], iteration_bounds = array<i64: 2>, scalar_prefetch = 0 : i64, scratch_operands = 0 : i64, tpu.core_type = #tpu.core_type<tc>, window_params = [{transform_indices = @transform_0, window_bounds = array<i64: 1, 8, 32>}, {transform_indices = @transform_1, window_bounds = array<i64: 1, 8, 32>}, {transform_indices = @transform_2, window_bounds = array<i64: 1, 8, 32>}, {pipeline_mode = #tpu.pipeline_mode<synchronous>, transform_indices = @transform_3, window_bounds = array<i64: 32, 32>}, {pipeline_mode = #tpu.pipeline_mode<synchronous>, transform_indices = @transform_4, window_bounds = array<i64: 32, 32>}, {pipeline_mode = #tpu.pipeline_mode<synchronous>, transform_indices = @transform_5, window_bounds = array<i64: 32, 32>}, {pipeline_mode = #tpu.pipeline_mode<synchronous>, transform_indices = @transform_6, window_bounds = array<i64: 1, 32>}, {pipeline_mode = #tpu.pipeline_mode<synchronous>, transform_indices = @transform_7, window_bounds = array<i64: 1, 32>}, {pipeline_mode = #tpu.pipeline_mode<synchronous>, transform_indices = @transform_8, window_bounds = array<i64: 1, 32>}, {pipeline_mode = #tpu.pipeline_mode<synchronous>, transform_indices = @transform_9, window_bounds = array<i64: 32, 32>}, {pipeline_mode = #tpu.pipeline_mode<synchronous>, transform_indices = @transform_10, window_bounds = array<i64: 1, 32>}, {pipeline_mode = #tpu.pipeline_mode<synchronous>, transform_indices = @transform_11, window_bounds = array<i64: 1, 32>}, {pipeline_mode = #tpu.pipeline_mode<synchronous>, transform_indices = @transform_12, window_bounds = array<i64: 1, 32>}, {transform_indices = @transform_13, window_bounds = array<i64: 1, 8, 32>}, {transform_indices = @transform_14, window_bounds = array<i64: 2, 1, 8, 8>}]} {
    %c0 = arith.constant 0 : index
    %c0_0 = arith.constant 0 : index
    %c0_1 = arith.constant 0 : index
    %0 = vector.load %arg1[%c0, %c0_0, %c0_1] : memref<1x8x32xf32, #tpu.memory_space<vmem>>, vector<1x8x32xf32>
    %1 = vector.shape_cast %0 : vector<1x8x32xf32> to vector<8x32xf32>
    %c0_2 = arith.constant 0 : index
    %c0_3 = arith.constant 0 : index
    %c0_4 = arith.constant 0 : index
    %2 = vector.load %arg2[%c0_2, %c0_3, %c0_4] : memref<1x8x32xf32, #tpu.memory_space<vmem>>, vector<1x8x32xf32>
    %3 = vector.shape_cast %2 : vector<1x8x32xf32> to vector<8x32xf32>
    %c0_5 = arith.constant 0 : index
    %c0_6 = arith.constant 0 : index
    %c0_7 = arith.constant 0 : index
    %4 = vector.load %arg3[%c0_5, %c0_6, %c0_7] : memref<1x8x32xf32, #tpu.memory_space<vmem>>, vector<1x8x32xf32>
    %5 = vector.shape_cast %4 : vector<1x8x32xf32> to vector<8x32xf32>
    %c0_8 = arith.constant 0 : index
    %c0_9 = arith.constant 0 : index
    %6 = vector.load %arg4[%c0_8, %c0_9] : memref<32x32xf32, #tpu.memory_space<vmem>>, vector<32x32xf32>
    %cst = arith.constant dense<0.000000e+00> : vector<8x32xf32>
    %7 = tpu.matmul %1, %6, %cst {dimension_numbers = #tpu.dot_dimension_numbers<[1], [0], [0], [1], [0, 0, 1, 1], [], []>} : vector<8x32xf32>, vector<32x32xf32>, vector<8x32xf32> -> vector<8x32xf32>
    %c0_10 = arith.constant 0 : index
    %c0_11 = arith.constant 0 : index
    %8 = vector.load %arg7[%c0_10, %c0_11] : memref<1x32xf32, #tpu.memory_space<vmem>>, vector<1x32xf32>
    %9 = vector.broadcast %8 : vector<1x32xf32> to vector<8x32xf32>
    %10 = arith.addf %7, %9 : vector<8x32xf32>
    %c0_12 = arith.constant 0 : index
    %c0_13 = arith.constant 0 : index
    %11 = vector.load %arg5[%c0_12, %c0_13] : memref<32x32xf32, #tpu.memory_space<vmem>>, vector<32x32xf32>
    %cst_14 = arith.constant dense<0.000000e+00> : vector<8x32xf32>
    %12 = tpu.matmul %3, %11, %cst_14 {dimension_numbers = #tpu.dot_dimension_numbers<[1], [0], [0], [1], [0, 0, 1, 1], [], []>} : vector<8x32xf32>, vector<32x32xf32>, vector<8x32xf32> -> vector<8x32xf32>
    %c0_15 = arith.constant 0 : index
    %c0_16 = arith.constant 0 : index
    %13 = vector.load %arg8[%c0_15, %c0_16] : memref<1x32xf32, #tpu.memory_space<vmem>>, vector<1x32xf32>
    %14 = vector.broadcast %13 : vector<1x32xf32> to vector<8x32xf32>
    %15 = arith.addf %12, %14 : vector<8x32xf32>
    %c0_17 = arith.constant 0 : index
    %c0_18 = arith.constant 0 : index
    %16 = vector.load %arg6[%c0_17, %c0_18] : memref<32x32xf32, #tpu.memory_space<vmem>>, vector<32x32xf32>
    %cst_19 = arith.constant dense<0.000000e+00> : vector<8x32xf32>
    %17 = tpu.matmul %5, %16, %cst_19 {dimension_numbers = #tpu.dot_dimension_numbers<[1], [0], [0], [1], [0, 0, 1, 1], [], []>} : vector<8x32xf32>, vector<32x32xf32>, vector<8x32xf32> -> vector<8x32xf32>
    %c0_20 = arith.constant 0 : index
    %c0_21 = arith.constant 0 : index
    %18 = vector.load %arg9[%c0_20, %c0_21] : memref<1x32xf32, #tpu.memory_space<vmem>>, vector<1x32xf32>
    %19 = vector.broadcast %18 : vector<1x32xf32> to vector<8x32xf32>
    %20 = arith.addf %17, %19 : vector<8x32xf32>
    %c0_22 = arith.constant 0 : index
    %c0_23 = arith.constant 0 : index
    %21 = vector.load %arg10[%c0_22, %c0_23] : memref<32x32xf32, #tpu.memory_space<vmem>>, vector<32x32xf32>
    %c0_24 = arith.constant 0 : index
    %c0_25 = arith.constant 0 : index
    %22 = vector.load %arg11[%c0_24, %c0_25] : memref<1x32xf32, #tpu.memory_space<vmem>>, vector<1x32xf32>
    %23 = vector.broadcast %22 : vector<1x32xf32> to vector<8x32xf32>
    %24 = arith.addf %1, %23 : vector<8x32xf32>
    %25 = vector.extract_strided_slice %10 {offsets = [0, 0], sizes = [8, 16], strides = [1, 1]} : vector<8x32xf32> to vector<8x16xf32>
    %26 = vector.extract_strided_slice %15 {offsets = [0, 0], sizes = [8, 16], strides = [1, 1]} : vector<8x32xf32> to vector<8x16xf32>
    %27 = vector.extract_strided_slice %20 {offsets = [0, 0], sizes = [8, 16], strides = [1, 1]} : vector<8x32xf32> to vector<8x16xf32>
    %cst_26 = arith.constant dense<0.000000e+00> : vector<8x8xf32>
    %28 = tpu.matmul %25, %26, %cst_26 {dimension_numbers = #tpu.dot_dimension_numbers<[1], [1], [0], [0], [0, 0, 1, 0], [], []>} : vector<8x16xf32>, vector<8x16xf32>, vector<8x8xf32> -> vector<8x8xf32>
    %cst_27 = arith.constant 2.500000e-01 : f32
    %29 = vector.broadcast %cst_27 : f32 to vector<8x8xf32>
    %30 = arith.mulf %28, %29 : vector<8x8xf32>
    %cst_28 = arith.constant dense<0xFF800000> : vector<8xf32>
    %31 = vector.multi_reduction <maximumf>, %30, %cst_28 [1] : vector<8x8xf32> to vector<8xf32>
    %32 = vector.shape_cast %31 : vector<8xf32> to vector<8x1xf32>
    %33 = vector.broadcast %32 : vector<8x1xf32> to vector<8x8xf32>
    %34 = arith.subf %30, %33 : vector<8x8xf32>
    %35 = math.exp %34 : vector<8x8xf32>
    %cst_29 = arith.constant dense<0.000000e+00> : vector<8xf32>
    %36 = vector.multi_reduction <add>, %35, %cst_29 [1] : vector<8x8xf32> to vector<8xf32>
    %37 = vector.shape_cast %36 : vector<8xf32> to vector<8x1xf32>
    %38 = tpu.reciprocal %37 {approx = true} : vector<8x1xf32> -> vector<8x1xf32>
    %39 = vector.broadcast %38 : vector<8x1xf32> to vector<8x8xf32>
    %40 = arith.mulf %35, %39 : vector<8x8xf32>
    %c0_30 = arith.constant 0 : index
    %c0_31 = arith.constant 0 : index
    %c0_32 = arith.constant 0 : index
    %c0_33 = arith.constant 0 : index
    %41 = vector.load %arg15[%c0_30, %c0_31, %c0_32, %c0_33] : memref<2x1x8x8xf32, #tpu.memory_space<vmem>>, vector<1x1x8x8xf32>
    %42 = vector.shape_cast %41 : vector<1x1x8x8xf32> to vector<8x8xf32>
    %43 = vector.shape_cast %40 : vector<8x8xf32> to vector<1x1x8x8xf32>
    tpu.vector_store %arg15[%c0_30, %c0_31, %c0_32, %c0_33], %43 {strides = array<i32>} : memref<2x1x8x8xf32, #tpu.memory_space<vmem>>, vector<1x1x8x8xf32>,
    %cst_34 = arith.constant dense<0.000000e+00> : vector<8x16xf32>
    %44 = tpu.matmul %40, %27, %cst_34 {dimension_numbers = #tpu.dot_dimension_numbers<[1], [0], [0], [1], [0, 0, 1, 1], [], []>} : vector<8x8xf32>, vector<8x16xf32>, vector<8x16xf32> -> vector<8x16xf32>
    %45 = vector.extract_strided_slice %21 {offsets = [0, 0], sizes = [16, 32], strides = [1, 1]} : vector<32x32xf32> to vector<16x32xf32>
    %cst_35 = arith.constant dense<0.000000e+00> : vector<8x32xf32>
    %46 = tpu.matmul %44, %45, %cst_35 {dimension_numbers = #tpu.dot_dimension_numbers<[1], [0], [0], [1], [0, 0, 1, 1], [], []>} : vector<8x16xf32>, vector<16x32xf32>, vector<8x32xf32> -> vector<8x32xf32>
    %47 = arith.addf %24, %46 : vector<8x32xf32>
    %48 = vector.extract_strided_slice %10 {offsets = [0, 16], sizes = [8, 16], strides = [1, 1]} : vector<8x32xf32> to vector<8x16xf32>
    %49 = vector.extract_strided_slice %15 {offsets = [0, 16], sizes = [8, 16], strides = [1, 1]} : vector<8x32xf32> to vector<8x16xf32>
    %50 = vector.extract_strided_slice %20 {offsets = [0, 16], sizes = [8, 16], strides = [1, 1]} : vector<8x32xf32> to vector<8x16xf32>
    %cst_36 = arith.constant dense<0.000000e+00> : vector<8x8xf32>
    %51 = tpu.matmul %48, %49, %cst_36 {dimension_numbers = #tpu.dot_dimension_numbers<[1], [1], [0], [0], [0, 0, 1, 0], [], []>} : vector<8x16xf32>, vector<8x16xf32>, vector<8x8xf32> -> vector<8x8xf32>
    %cst_37 = arith.constant 2.500000e-01 : f32
    %52 = vector.broadcast %cst_37 : f32 to vector<8x8xf32>
    %53 = arith.mulf %51, %52 : vector<8x8xf32>
    %cst_38 = arith.constant dense<0xFF800000> : vector<8xf32>
    %54 = vector.multi_reduction <maximumf>, %53, %cst_38 [1] : vector<8x8xf32> to vector<8xf32>
    %55 = vector.shape_cast %54 : vector<8xf32> to vector<8x1xf32>
    %56 = vector.broadcast %55 : vector<8x1xf32> to vector<8x8xf32>
    %57 = arith.subf %53, %56 : vector<8x8xf32>
    %58 = math.exp %57 : vector<8x8xf32>
    %cst_39 = arith.constant dense<0.000000e+00> : vector<8xf32>
    %59 = vector.multi_reduction <add>, %58, %cst_39 [1] : vector<8x8xf32> to vector<8xf32>
    %60 = vector.shape_cast %59 : vector<8xf32> to vector<8x1xf32>
    %61 = tpu.reciprocal %60 {approx = true} : vector<8x1xf32> -> vector<8x1xf32>
    %62 = vector.broadcast %61 : vector<8x1xf32> to vector<8x8xf32>
    %63 = arith.mulf %58, %62 : vector<8x8xf32>
    %c1 = arith.constant 1 : index
    %c0_40 = arith.constant 0 : index
    %c0_41 = arith.constant 0 : index
    %c0_42 = arith.constant 0 : index
    %64 = vector.load %arg15[%c1, %c0_40, %c0_41, %c0_42] : memref<2x1x8x8xf32, #tpu.memory_space<vmem>>, vector<1x1x8x8xf32>
    %65 = vector.shape_cast %64 : vector<1x1x8x8xf32> to vector<8x8xf32>
    %66 = vector.shape_cast %63 : vector<8x8xf32> to vector<1x1x8x8xf32>
    tpu.vector_store %arg15[%c1, %c0_40, %c0_41, %c0_42], %66 {strides = array<i32>} : memref<2x1x8x8xf32, #tpu.memory_space<vmem>>, vector<1x1x8x8xf32>,
    %cst_43 = arith.constant dense<0.000000e+00> : vector<8x16xf32>
    %67 = tpu.matmul %63, %50, %cst_43 {dimension_numbers = #tpu.dot_dimension_numbers<[1], [0], [0], [1], [0, 0, 1, 1], [], []>} : vector<8x8xf32>, vector<8x16xf32>, vector<8x16xf32> -> vector<8x16xf32>
    %68 = vector.extract_strided_slice %21 {offsets = [16, 0], sizes = [16, 32], strides = [1, 1]} : vector<32x32xf32> to vector<16x32xf32>
    %cst_44 = arith.constant dense<0.000000e+00> : vector<8x32xf32>
    %69 = tpu.matmul %67, %68, %cst_44 {dimension_numbers = #tpu.dot_dimension_numbers<[1], [0], [0], [1], [0, 0, 1, 1], [], []>} : vector<8x16xf32>, vector<16x32xf32>, vector<8x32xf32> -> vector<8x32xf32>
    %70 = arith.addf %47, %69 : vector<8x32xf32>
    %cst_45 = arith.constant dense<0.000000e+00> : vector<8xf32>
    %71 = vector.multi_reduction <add>, %70, %cst_45 [1] : vector<8x32xf32> to vector<8xf32>
    %72 = vector.shape_cast %71 : vector<8xf32> to vector<8x1xf32>
    %cst_46 = arith.constant 3.200000e+01 : f32
    %73 = vector.broadcast %cst_46 : f32 to vector<8x1xf32>
    %74 = arith.divf %72, %73 : vector<8x1xf32>
    %75 = vector.broadcast %74 : vector<8x1xf32> to vector<8x32xf32>
    %76 = arith.subf %70, %75 : vector<8x32xf32>
    %77 = arith.mulf %76, %76 : vector<8x32xf32>
    %cst_47 = arith.constant dense<0.000000e+00> : vector<8xf32>
    %78 = vector.multi_reduction <add>, %77, %cst_47 [1] : vector<8x32xf32> to vector<8xf32>
    %79 = vector.shape_cast %78 : vector<8xf32> to vector<8x1xf32>
    %cst_48 = arith.constant 3.200000e+01 : f32
    %80 = vector.broadcast %cst_48 : f32 to vector<8x1xf32>
    %81 = arith.divf %79, %80 : vector<8x1xf32>
    %82 = vector.broadcast %74 : vector<8x1xf32> to vector<8x32xf32>
    %83 = arith.subf %70, %82 : vector<8x32xf32>
    %cst_49 = arith.constant 9.99999974E-6 : f32
    %84 = vector.broadcast %cst_49 : f32 to vector<8x1xf32>
    %85 = arith.addf %81, %84 : vector<8x1xf32>
    %86 = math.rsqrt %85 : vector<8x1xf32>
    %87 = vector.broadcast %86 : vector<8x1xf32> to vector<8x32xf32>
    %88 = arith.mulf %83, %87 : vector<8x32xf32>
    %c0_50 = arith.constant 0 : index
    %c0_51 = arith.constant 0 : index
    %89 = vector.load %arg12[%c0_50, %c0_51] : memref<1x32xf32, #tpu.memory_space<vmem>>, vector<1x32xf32>
    %90 = vector.broadcast %89 : vector<1x32xf32> to vector<8x32xf32>
    %91 = arith.mulf %88, %90 : vector<8x32xf32>
    %c0_52 = arith.constant 0 : index
    %c0_53 = arith.constant 0 : index
    %92 = vector.load %arg13[%c0_52, %c0_53] : memref<1x32xf32, #tpu.memory_space<vmem>>, vector<1x32xf32>
    %93 = vector.broadcast %92 : vector<1x32xf32> to vector<8x32xf32>
    %94 = arith.addf %91, %93 : vector<8x32xf32>
    %c0_54 = arith.constant 0 : index
    %c0_55 = arith.constant 0 : index
    %c0_56 = arith.constant 0 : index
    %95 = vector.load %arg14[%c0_54, %c0_55, %c0_56] : memref<1x8x32xf32, #tpu.memory_space<vmem>>, vector<1x8x32xf32>
    %96 = vector.shape_cast %95 : vector<1x8x32xf32> to vector<8x32xf32>
    %97 = vector.shape_cast %94 : vector<8x32xf32> to vector<1x8x32xf32>
    tpu.vector_store %arg14[%c0_54, %c0_55, %c0_56], %97 {strides = array<i32>} : memref<1x8x32xf32, #tpu.memory_space<vmem>>, vector<1x8x32xf32>,
    return
  }
  func.func @transform_0(%arg0: i32) -> (i32, i32, i32) {
    %c0_i32 = arith.constant 0 : i32
    %c0_i32_0 = arith.constant 0 : i32
    %c0_i32_1 = arith.constant 0 : i32
    return %arg0, %c0_i32, %c0_i32_0 : i32, i32, i32
  }
  func.func @transform_1(%arg0: i32) -> (i32, i32, i32) {
    %c0_i32 = arith.constant 0 : i32
    %c0_i32_0 = arith.constant 0 : i32
    %c0_i32_1 = arith.constant 0 : i32
    return %arg0, %c0_i32, %c0_i32_0 : i32, i32, i32
  }
  func.func @transform_2(%arg0: i32) -> (i32, i32, i32) {
    %c0_i32 = arith.constant 0 : i32
    %c0_i32_0 = arith.constant 0 : i32
    %c0_i32_1 = arith.constant 0 : i32
    return %arg0, %c0_i32, %c0_i32_0 : i32, i32, i32
  }
  func.func @transform_3(%arg0: i32) -> (i32, i32) {
    %c0_i32 = arith.constant 0 : i32
    %c0_i32_0 = arith.constant 0 : i32
    %c0_i32_1 = arith.constant 0 : i32
    return %c0_i32, %c0_i32_0 : i32, i32
  }
  func.func @transform_4(%arg0: i32) -> (i32, i32) {
    %c0_i32 = arith.constant 0 : i32
    %c0_i32_0 = arith.constant 0 : i32
    %c0_i32_1 = arith.constant 0 : i32
    return %c0_i32, %c0_i32_0 : i32, i32
  }
  func.func @transform_5(%arg0: i32) -> (i32, i32) {
    %c0_i32 = arith.constant 0 : i32
    %c0_i32_0 = arith.constant 0 : i32
    %c0_i32_1 = arith.constant 0 : i32
    return %c0_i32, %c0_i32_0 : i32, i32
  }
  func.func @transform_6(%arg0: i32) -> (i32, i32) {
    %c0_i32 = arith.constant 0 : i32
    %c0_i32_0 = arith.constant 0 : i32
    %c0_i32_1 = arith.constant 0 : i32
    return %c0_i32, %c0_i32_0 : i32, i32
  }
  func.func @transform_7(%arg0: i32) -> (i32, i32) {
    %c0_i32 = arith.constant 0 : i32
    %c0_i32_0 = arith.constant 0 : i32
    %c0_i32_1 = arith.constant 0 : i32
    return %c0_i32, %c0_i32_0 : i32, i32
  }
  func.func @transform_8(%arg0: i32) -> (i32, i32) {
    %c0_i32 = arith.constant 0 : i32
    %c0_i32_0 = arith.constant 0 : i32
    %c0_i32_1 = arith.constant 0 : i32
    return %c0_i32, %c0_i32_0 : i32, i32
  }
  func.func @transform_9(%arg0: i32) -> (i32, i32) {
    %c0_i32 = arith.constant 0 : i32
    %c0_i32_0 = arith.constant 0 : i32
    %c0_i32_1 = arith.constant 0 : i32
    return %c0_i32, %c0_i32_0 : i32, i32
  }
  func.func @transform_10(%arg0: i32) -> (i32, i32) {
    %c0_i32 = arith.constant 0 : i32
    %c0_i32_0 = arith.constant 0 : i32
    %c0_i32_1 = arith.constant 0 : i32
    return %c0_i32, %c0_i32_0 : i32, i32
  }
  func.func @transform_11(%arg0: i32) -> (i32, i32) {
    %c0_i32 = arith.constant 0 : i32
    %c0_i32_0 = arith.constant 0 : i32
    %c0_i32_1 = arith.constant 0 : i32
    return %c0_i32, %c0_i32_0 : i32, i32
  }
  func.func @transform_12(%arg0: i32) -> (i32, i32) {
    %c0_i32 = arith.constant 0 : i32
    %c0_i32_0 = arith.constant 0 : i32
    %c0_i32_1 = arith.constant 0 : i32
    return %c0_i32, %c0_i32_0 : i32, i32
  }
  func.func @transform_13(%arg0: i32) -> (i32, i32, i32) {
    %c0_i32 = arith.constant 0 : i32
    %c0_i32_0 = arith.constant 0 : i32
    %c0_i32_1 = arith.constant 0 : i32
    return %arg0, %c0_i32, %c0_i32_0 : i32, i32, i32
  }
  func.func @transform_14(%arg0: i32) -> (i32, i32, i32, i32) {
    %c0_i32 = arith.constant 0 : i32
    %c0_i32_0 = arith.constant 0 : i32
    %c0_i32_1 = arith.constant 0 : i32
    %c0_i32_2 = arith.constant 0 : i32
    return %c0_i32, %arg0, %c0_i32_0, %c0_i32_1 : i32, i32, i32, i32
  }
}

</mosaic_0001>

<llo_original>
// kernel: tpu_custom_call.1
$region0: #{tpu_custom_call.1}
  #allocation0 [shape = 'u32[]', space=smem, size = 0x4, offset = 0x4, fixed_abs, tag = 'smem constant byte address 0x4 - core index']
  #allocation1 [shape = 'u32[144,128]{1,0:T(1,128)}', space=vmem, size = 0x12000, scoped, tag = 'internal scratch']
  %s0 = inlined_call_operand.hbm [shape: f32[2,8,32], index: 0, kind: input, shape index: {}]
  %s1 = inlined_call_operand.hbm [shape: f32[2,8,32], index: 1, kind: input, shape index: {}]
  %s2 = inlined_call_operand.hbm [shape: f32[2,8,32], index: 2, kind: input, shape index: {}]
  %s3 = inlined_call_operand.hbm [shape: f32[32,32], index: 3, kind: input, shape index: {}]
  %s4 = inlined_call_operand.hbm [shape: f32[32,32], index: 4, kind: input, shape index: {}]
  %s5 = inlined_call_operand.hbm [shape: f32[32,32], index: 5, kind: input, shape index: {}]
  %s6 = inlined_call_operand.vmem [shape: f32[1,32], index: 6, kind: input, shape index: {}]
  %s7 = inlined_call_operand.vmem [shape: f32[1,32], index: 7, kind: input, shape index: {}]
  %s8 = inlined_call_operand.vmem [shape: f32[1,32], index: 8, kind: input, shape index: {}]
  %s9 = inlined_call_operand.hbm [shape: f32[32,32], index: 9, kind: input, shape index: {}]
  %s10 = inlined_call_operand.vmem [shape: f32[1,32], index: 10, kind: input, shape index: {}]
  %s11 = inlined_call_operand.vmem [shape: f32[1,32], index: 11, kind: input, shape index: {}]
  %s12 = inlined_call_operand.vmem [shape: f32[1,32], index: 12, kind: input, shape index: {}]
  %s13 = inlined_call_operand.hbm [shape: f32[2,8,32], index: 13, kind: output, shape index: {0}]
  %s14 = inlined_call_operand.hbm [shape: f32[2,2,8,8], index: 14, kind: output, shape index: {1}]
  %15 = xla_tuple %s13, %s14
  %s16 = sld [smem:[#allocation0]]
  $region121: #{tpu_custom_call.1} parent=0
    _
  %s18 = ssub.s32 1, %s16
  %s19 = scalar_select 0, %s18, %s16
  $region1: #{tpu_custom_call.1} parent=0
    #allocation2 [shape = 'u8[8192]{0}', space=vmem, size = 0x2000, scoped, tag = 'input window, operand 0']
    #allocation3 [shape = 's32[2]{0}', space=sflag, size = 0x8, scoped, tag = 'scoped memory for tpu_custom_call.1']
    #allocation4 [shape = 's32[2]{0}', space=sflag, size = 0x8, scoped, tag = 'scoped memory for tpu_custom_call.1']
    #allocation5 [shape = 'u8[8192]{0}', space=vmem, size = 0x2000, scoped, tag = 'input window, operand 1']
    #allocation6 [shape = 's32[2]{0}', space=sflag, size = 0x8, scoped, tag = 'scoped memory for tpu_custom_call.1']
    #allocation7 [shape = 'u8[8192]{0}', space=vmem, size = 0x2000, scoped, tag = 'input window, operand 2']
    #allocation8 [shape = 'u8[16384]{0}', space=vmem, size = 0x4000, scoped, tag = 'input window, operand 3, single buffered']
    #allocation9 [shape = 's32[1]{0}', space=sflag, size = 0x4, scoped, tag = 'scoped memory for tpu_custom_call.1']
    #allocation10 [shape = 'u8[16384]{0}', space=vmem, size = 0x4000, scoped, tag = 'input window, operand 4, single buffered']
    #allocation11 [shape = 'u8[16384]{0}', space=vmem, size = 0x4000, scoped, tag = 'input window, operand 5, single buffered']
    #allocation12 [shape = 's32[1]{0}', space=sflag, size = 0x4, scoped, tag = 'scoped memory for tpu_custom_call.1']
    #allocation13 [shape = 'u8[16384]{0}', space=vmem, size = 0x4000, scoped, tag = 'input window, operand 9, single buffered']
    #allocation14 [shape = 'u8[8192]{0}', space=vmem, size = 0x2000, scoped, tag = 'output window, operand 0']
    #allocation15 [shape = 'u8[16384]{0}', space=vmem, size = 0x4000, scoped, tag = 'output window, operand 1']
    #allocation16 [shape = 's32[2]{0}', space=sflag, size = 0x8, scoped, tag = 'scoped memory for tpu_custom_call.1']
    %20 = vsyncpa [#allocation3], 0
    %s21 = scalar_lea.sflag [#allocation3], 1
    %22 = vsyncpa %s21, 0
    %23 = vsyncpa [#allocation6], 0
    %s24 = scalar_lea.sflag [#allocation6], 1
    %25 = vsyncpa %s24, 0
    %26 = vsyncpa [#allocation9], 0
    %27 = vsyncpa [#allocation12], 0
    %28 = vsyncpa [#allocation4], 0
    %s29 = scalar_lea.sflag [#allocation4], 1
    %30 = vsyncpa %s29, 0
    %31 = vsyncpa [#allocation16], 0
    %s32 = scalar_lea.sflag [#allocation16], 1
    %33 = vsyncpa %s32, 0
    loop: start=0, step=1, limit=4
    $region2: #{tpu_custom_call.1} parent=1 // loop_pre_header
      _
    $region3: #{tpu_custom_call.1} parent=1 // loop_header
      %s35 = sphi 0, %s39
      %p36 = scmp.ge.s32.totalorder %s35, 4
      %s45 = sphi 0, %s47
      %s48 = sphi 0, %s45
      %s49 = sphi 0, %s48
      %s65 = sphi 0, %s49
      %s71 = sphi 0, %s73
      %s74 = sphi 0, %s71
      %s75 = sphi 0, %s74
      %s91 = sphi 0, %s75
      %s97 = sphi 0, %s99
      %s100 = sphi 0, %s97
      %s101 = sphi 0, %s100
      %s117 = sphi 0, %s101
      %s121 = sphi 0, %s121
      %s123 = sphi 0, %s121
      %s124 = sphi 0, %s123
      %s138 = sphi 0, %s124
      %s142 = sphi 0, %s142
      %s144 = sphi 0, %s142
      %s145 = sphi 0, %s144
      %s159 = sphi 0, %s145
      %s163 = sphi 0, %s163
      %s165 = sphi 0, %s163
      %s166 = sphi 0, %s165
      %s180 = sphi 0, %s166
      %s184 = sphi 0, %s184
      %s186 = sphi 0, %s184
      %s187 = sphi 0, %s186
      %s201 = sphi 0, %s187
      %s205 = sphi 0, %s205
      %s207 = sphi 0, %s205
      %s208 = sphi 0, %s207
      %s222 = sphi 0, %s208
      %s226 = sphi 0, %s226
      %s228 = sphi 0, %s226
      %s229 = sphi 0, %s228
      %s243 = sphi 0, %s229
      %s247 = sphi 0, %s247
      %s249 = sphi 0, %s247
      %s250 = sphi 0, %s249
      %s264 = sphi 0, %s250
      %s268 = sphi 0, %s268
      %s270 = sphi 0, %s268
      %s271 = sphi 0, %s270
      %s285 = sphi 0, %s271
      %s289 = sphi 0, %s289
      %s291 = sphi 0, %s289
      %s292 = sphi 0, %s291
      %s306 = sphi 0, %s292
      %s310 = sphi 0, %s310
      %s312 = sphi 0, %s310
      %s313 = sphi 0, %s312
      %s327 = sphi 0, %s313
      %s333 = sphi 0, %s335
      %s336 = sphi 0, %s333
      %s337 = sphi 0, %s336
      %s353 = sphi 0, %s337
      %s359 = sphi 0, %s361
      %s362 = sphi 0, %s359
      %s363 = sphi 0, %s362
      %s379 = sphi 0, %s363
    $region4: #{tpu_custom_call.1} parent=1 // loop_header_branch
      %38 = sbr.rel (%p36) target = $region8
    $region5: #{tpu_custom_call.1} parent=1 // loop_body
      %s40 = ssub.s32 %s35, 1
      %s41 = ssub.s32 %s35, 2
      %s42 = sadd.s32 %s35, 1
      %s43 = ssub.s32 %s35, %s42
      %p44 = scmp.eq.s32.totalorder %s43, 0
      %s46 = sadd.s32 %s45, 1
      %s47 = scalar_select %p44, %s45, %s46
      %p50 = pneg %p44
      %p51 = scmp.eq.s32.totalorder %s35, 1
      %p52 = por %p50, %p51
      %p53 = scmp.ne.s32.totalorder %s45, %s48
      %p54 = scmp.eq.s32.totalorder %s35, 0
      %p55 = por %p53, %p54
      %p56 = scmp.ne.s32.totalorder %s45, %s48
      %p57 = scmp.eq.s32.totalorder %s40, 1
      %p58 = por %p56, %p57
      %p59 = scmp.ne.s32.totalorder %s48, %s49
      %p60 = scmp.eq.s32.totalorder %s40, 0
      %p61 = por %p59, %p60
      %p62 = scmp.ne.s32.totalorder %s48, %s49
      %p63 = scmp.eq.s32.totalorder %s41, 1
      %p64 = por %p62, %p63
      %p66 = scmp.ne.s32.totalorder %s49, %s65
      %p67 = scmp.eq.s32.totalorder %s41, 0
      %p68 = por %p66, %p67
      %s69 = ssub.s32 %s35, %s42
      %p70 = scmp.eq.s32.totalorder %s69, 0
      %s72 = sadd.s32 %s71, 1
      %s73 = scalar_select %p70, %s71, %s72
      %p76 = pneg %p70
      %p77 = scmp.eq.s32.totalorder %s35, 1
      %p78 = por %p76, %p77
      %p79 = scmp.ne.s32.totalorder %s71, %s74
      %p80 = scmp.eq.s32.totalorder %s35, 0
      %p81 = por %p79, %p80
      %p82 = scmp.ne.s32.totalorder %s71, %s74
      %p83 = scmp.eq.s32.totalorder %s40, 1
      %p84 = por %p82, %p83
      %p85 = scmp.ne.s32.totalorder %s74, %s75
      %p86 = scmp.eq.s32.totalorder %s40, 0
      %p87 = por %p85, %p86
      %p88 = scmp.ne.s32.totalorder %s74, %s75
      %p89 = scmp.eq.s32.totalorder %s41, 1
      %p90 = por %p88, %p89
      %p92 = scmp.ne.s32.totalorder %s75, %s91
      %p93 = scmp.eq.s32.totalorder %s41, 0
      %p94 = por %p92, %p93
      %s95 = ssub.s32 %s35, %s42
      %p96 = scmp.eq.s32.totalorder %s95, 0
      %s98 = sadd.s32 %s97, 1
      %s99 = scalar_select %p96, %s97, %s98
      %p102 = pneg %p96
      %p103 = scmp.eq.s32.totalorder %s35, 1
      %p104 = por %p102, %p103
      %p105 = scmp.ne.s32.totalorder %s97, %s100
      %p106 = scmp.eq.s32.totalorder %s35, 0
      %p107 = por %p105, %p106
      %p108 = scmp.ne.s32.totalorder %s97, %s100
      %p109 = scmp.eq.s32.totalorder %s40, 1
      %p110 = por %p108, %p109
      %p111 = scmp.ne.s32.totalorder %s100, %s101
      %p112 = scmp.eq.s32.totalorder %s40, 0
      %p113 = por %p111, %p112
      %p114 = scmp.ne.s32.totalorder %s100, %s101
      %p115 = scmp.eq.s32.totalorder %s41, 1
      %p116 = por %p114, %p115
      %p118 = scmp.ne.s32.totalorder %s101, %s117
      %p119 = scmp.eq.s32.totalorder %s41, 0
      %p120 = por %p118, %p119
      %s122 = sadd.s32 %s121, 1
      %p125 = scmp.eq.s32.totalorder %s35, 1
      %p126 = scmp.ne.s32.totalorder %s121, %s123
      %p127 = scmp.eq.s32.totalorder %s35, 0
      %p128 = por %p126, %p127
      %p129 = scmp.ne.s32.totalorder %s121, %s123
      %p130 = scmp.eq.s32.totalorder %s40, 1
      %p131 = por %p129, %p130
      %p132 = scmp.ne.s32.totalorder %s123, %s124
      %p133 = scmp.eq.s32.totalorder %s40, 0
      %p134 = por %p132, %p133
      %p135 = scmp.ne.s32.totalorder %s123, %s124
      %p136 = scmp.eq.s32.totalorder %s41, 1
      %p137 = por %p135, %p136
      %p139 = scmp.ne.s32.totalorder %s124, %s138
      %p140 = scmp.eq.s32.totalorder %s41, 0
      %p141 = por %p139, %p140
      %s143 = sadd.s32 %s142, 1
      %p146 = scmp.eq.s32.totalorder %s35, 1
      %p147 = scmp.ne.s32.totalorder %s142, %s144
      %p148 = scmp.eq.s32.totalorder %s35, 0
      %p149 = por %p147, %p148
      %p150 = scmp.ne.s32.totalorder %s142, %s144
      %p151 = scmp.eq.s32.totalorder %s40, 1
      %p152 = por %p150, %p151
      %p153 = scmp.ne.s32.totalorder %s144, %s145
      %p154 = scmp.eq.s32.totalorder %s40, 0
      %p155 = por %p153, %p154
      %p156 = scmp.ne.s32.totalorder %s144, %s145
      %p157 = scmp.eq.s32.totalorder %s41, 1
      %p158 = por %p156, %p157
      %p160 = scmp.ne.s32.totalorder %s145, %s159
      %p161 = scmp.eq.s32.totalorder %s41, 0
      %p162 = por %p160, %p161
      %s164 = sadd.s32 %s163, 1
      %p167 = scmp.eq.s32.totalorder %s35, 1
      %p168 = scmp.ne.s32.totalorder %s163, %s165
      %p169 = scmp.eq.s32.totalorder %s35, 0
      %p170 = por %p168, %p169
      %p171 = scmp.ne.s32.totalorder %s163, %s165
      %p172 = scmp.eq.s32.totalorder %s40, 1
      %p173 = por %p171, %p172
      %p174 = scmp.ne.s32.totalorder %s165, %s166
      %p175 = scmp.eq.s32.totalorder %s40, 0
      %p176 = por %p174, %p175
      %p177 = scmp.ne.s32.totalorder %s165, %s166
      %p178 = scmp.eq.s32.totalorder %s41, 1
      %p179 = por %p177, %p178
      %p181 = scmp.ne.s32.totalorder %s166, %s180
      %p182 = scmp.eq.s32.totalorder %s41, 0
      %p183 = por %p181, %p182
      %s185 = sadd.s32 %s184, 1
      %p188 = scmp.eq.s32.totalorder %s35, 1
      %p189 = scmp.ne.s32.totalorder %s184, %s186
      %p190 = scmp.eq.s32.totalorder %s35, 0
      %p191 = por %p189, %p190
      %p192 = scmp.ne.s32.totalorder %s184, %s186
      %p193 = scmp.eq.s32.totalorder %s40, 1
      %p194 = por %p192, %p193
      %p195 = scmp.ne.s32.totalorder %s186, %s187
      %p196 = scmp.eq.s32.totalorder %s40, 0
      %p197 = por %p195, %p196
      %p198 = scmp.ne.s32.totalorder %s186, %s187
      %p199 = scmp.eq.s32.totalorder %s41, 1
      %p200 = por %p198, %p199
      %p202 = scmp.ne.s32.totalorder %s187, %s201
      %p203 = scmp.eq.s32.totalorder %s41, 0
      %p204 = por %p202, %p203
      %s206 = sadd.s32 %s205, 1
      %p209 = scmp.eq.s32.totalorder %s35, 1
      %p210 = scmp.ne.s32.totalorder %s205, %s207
      %p211 = scmp.eq.s32.totalorder %s35, 0
      %p212 = por %p210, %p211
      %p213 = scmp.ne.s32.totalorder %s205, %s207
      %p214 = scmp.eq.s32.totalorder %s40, 1
      %p215 = por %p213, %p214
      %p216 = scmp.ne.s32.totalorder %s207, %s208
      %p217 = scmp.eq.s32.totalorder %s40, 0
      %p218 = por %p216, %p217
      %p219 = scmp.ne.s32.totalorder %s207, %s208
      %p220 = scmp.eq.s32.totalorder %s41, 1
      %p221 = por %p219, %p220
      %p223 = scmp.ne.s32.totalorder %s208, %s222
      %p224 = scmp.eq.s32.totalorder %s41, 0
      %p225 = por %p223, %p224
      %s227 = sadd.s32 %s226, 1
      %p230 = scmp.eq.s32.totalorder %s35, 1
      %p231 = scmp.ne.s32.totalorder %s226, %s228
      %p232 = scmp.eq.s32.totalorder %s35, 0
      %p233 = por %p231, %p232
      %p234 = scmp.ne.s32.totalorder %s226, %s228
      %p235 = scmp.eq.s32.totalorder %s40, 1
      %p236 = por %p234, %p235
      %p237 = scmp.ne.s32.totalorder %s228, %s229
      %p238 = scmp.eq.s32.totalorder %s40, 0
      %p239 = por %p237, %p238
      %p240 = scmp.ne.s32.totalorder %s228, %s229
      %p241 = scmp.eq.s32.totalorder %s41, 1
      %p242 = por %p240, %p241
      %p244 = scmp.ne.s32.totalorder %s229, %s243
      %p245 = scmp.eq.s32.totalorder %s41, 0
      %p246 = por %p244, %p245
      %s248 = sadd.s32 %s247, 1
      %p251 = scmp.eq.s32.totalorder %s35, 1
      %p252 = scmp.ne.s32.totalorder %s247, %s249
      %p253 = scmp.eq.s32.totalorder %s35, 0
      %p254 = por %p252, %p253
      %p255 = scmp.ne.s32.totalorder %s247, %s249
      %p256 = scmp.eq.s32.totalorder %s40, 1
      %p257 = por %p255, %p256
      %p258 = scmp.ne.s32.totalorder %s249, %s250
      %p259 = scmp.eq.s32.totalorder %s40, 0
      %p260 = por %p258, %p259
      %p261 = scmp.ne.s32.totalorder %s249, %s250
      %p262 = scmp.eq.s32.totalorder %s41, 1
      %p263 = por %p261, %p262
      %p265 = scmp.ne.s32.totalorder %s250, %s264
      %p266 = scmp.eq.s32.totalorder %s41, 0
      %p267 = por %p265, %p266
      %s269 = sadd.s32 %s268, 1
      %p272 = scmp.eq.s32.totalorder %s35, 1
      %p273 = scmp.ne.s32.totalorder %s268, %s270
      %p274 = scmp.eq.s32.totalorder %s35, 0
      %p275 = por %p273, %p274
      %p276 = scmp.ne.s32.totalorder %s268, %s270
      %p277 = scmp.eq.s32.totalorder %s40, 1
      %p278 = por %p276, %p277
      %p279 = scmp.ne.s32.totalorder %s270, %s271
      %p280 = scmp.eq.s32.totalorder %s40, 0
      %p281 = por %p279, %p280
      %p282 = scmp.ne.s32.totalorder %s270, %s271
      %p283 = scmp.eq.s32.totalorder %s41, 1
      %p284 = por %p282, %p283
      %p286 = scmp.ne.s32.totalorder %s271, %s285
      %p287 = scmp.eq.s32.totalorder %s41, 0
      %p288 = por %p286, %p287
      %s290 = sadd.s32 %s289, 1
      %p293 = scmp.eq.s32.totalorder %s35, 1
      %p294 = scmp.ne.s32.totalorder %s289, %s291
      %p295 = scmp.eq.s32.totalorder %s35, 0
      %p296 = por %p294, %p295
      %p297 = scmp.ne.s32.totalorder %s289, %s291
      %p298 = scmp.eq.s32.totalorder %s40, 1
      %p299 = por %p297, %p298
      %p300 = scmp.ne.s32.totalorder %s291, %s292
      %p301 = scmp.eq.s32.totalorder %s40, 0
      %p302 = por %p300, %p301
      %p303 = scmp.ne.s32.totalorder %s291, %s292
      %p304 = scmp.eq.s32.totalorder %s41, 1
      %p305 = por %p303, %p304
      %p307 = scmp.ne.s32.totalorder %s292, %s306
      %p308 = scmp.eq.s32.totalorder %s41, 0
      %p309 = por %p307, %p308
      %s311 = sadd.s32 %s310, 1
      %p314 = scmp.eq.s32.totalorder %s35, 1
      %p315 = scmp.ne.s32.totalorder %s310, %s312
      %p316 = scmp.eq.s32.totalorder %s35, 0
      %p317 = por %p315, %p316
      %p318 = scmp.ne.s32.totalorder %s310, %s312
      %p319 = scmp.eq.s32.totalorder %s40, 1
      %p320 = por %p318, %p319
      %p321 = scmp.ne.s32.totalorder %s312, %s313
      %p322 = scmp.eq.s32.totalorder %s40, 0
      %p323 = por %p321, %p322
      %p324 = scmp.ne.s32.totalorder %s312, %s313
      %p325 = scmp.eq.s32.totalorder %s41, 1
      %p326 = por %p324, %p325
      %p328 = scmp.ne.s32.totalorder %s313, %s327
      %p329 = scmp.eq.s32.totalorder %s41, 0
      %p330 = por %p328, %p329
      %s331 = ssub.s32 %s35, %s42
      %p332 = scmp.eq.s32.totalorder %s331, 0
      %s334 = sadd.s32 %s333, 1
      %s335 = scalar_select %p332, %s333, %s334
      %p338 = pneg %p332
      %p339 = scmp.eq.s32.totalorder %s35, 1
      %p340 = por %p338, %p339
      %p341 = scmp.ne.s32.totalorder %s333, %s336
      %p342 = scmp.eq.s32.totalorder %s35, 0
      %p343 = por %p341, %p342
      %p344 = scmp.ne.s32.totalorder %s333, %s336
      %p345 = scmp.eq.s32.totalorder %s40, 1
      %p346 = por %p344, %p345
      %p347 = scmp.ne.s32.totalorder %s336, %s337
      %p348 = scmp.eq.s32.totalorder %s40, 0
      %p349 = por %p347, %p348
      %p350 = scmp.ne.s32.totalorder %s336, %s337
      %p351 = scmp.eq.s32.totalorder %s41, 1
      %p352 = por %p350, %p351
      %p354 = scmp.ne.s32.totalorder %s337, %s353
      %p355 = scmp.eq.s32.totalorder %s41, 0
      %p356 = por %p354, %p355
      %s357 = ssub.s32 %s35, %s42
      %p358 = scmp.eq.s32.totalorder %s357, 0
      %s360 = sadd.s32 %s359, 1
      %s361 = scalar_select %p358, %s359, %s360
      %p364 = pneg %p358
      %p365 = scmp.eq.s32.totalorder %s35, 1
      %p366 = por %p364, %p365
      %p367 = scmp.ne.s32.totalorder %s359, %s362
      %p368 = scmp.eq.s32.totalorder %s35, 0
      %p369 = por %p367, %p368
      %p370 = scmp.ne.s32.totalorder %s359, %s362
      %p371 = scmp.eq.s32.totalorder %s40, 1
      %p372 = por %p370, %p371
      %p373 = scmp.ne.s32.totalorder %s362, %s363
      %p374 = scmp.eq.s32.totalorder %s40, 0
      %p375 = por %p373, %p374
      %p376 = scmp.ne.s32.totalorder %s362, %s363
      %p377 = scmp.eq.s32.totalorder %s41, 1
      %p378 = por %p376, %p377
      %p380 = scmp.ne.s32.totalorder %s363, %s379
      %p381 = scmp.eq.s32.totalorder %s41, 0
      %p382 = por %p380, %p381
      %p383 = scmp.le.s32.totalorder 1, %s35
      %p384 = scmp.lt.s32.totalorder %s35, 3
      %p385 = pnand %p383, %p384
      %p386 = pneg %p385
      // Predicated region
      $region9: #{tpu_custom_call.1} parent=5 // pred_check
        _
      $region10: #{tpu_custom_call.1} parent=5 // pred_check_branch
        %388 = sbr.rel (%p385) target = $region12
      $region11: #{tpu_custom_call.1} parent=5 // pred_region
        %s389 = ssub.s32 %s35, 1
        // Predicated region
        $region13: #{tpu_custom_call.1} parent=11 // pred_check
          %p390 = pneg %p134
        $region14: #{tpu_custom_call.1} parent=11 // pred_check_branch
          %392 = sbr.rel (%p390) target = $region16
        $region15: #{tpu_custom_call.1} parent=11 // pred_region
          %s394 = ssub.s32 512, 512
          %395 = vsyncadd [#allocation9], %s394
          %s396 = sshll.u32 [#allocation8], 4
          %s397 = int_to_ptr.vmem [resolvable:$true] %s396
          %402 = dma.hbm_to_vmem [thread:$0]  %s3, 512, %s397, [#allocation9], 128, 128, 8
        $region16: #{tpu_custom_call.1} parent=11 // pred_fallthru
          _
        // Predicated region
        $region17: #{tpu_custom_call.1} parent=11 // pred_check
          %p403 = pneg %p155
        $region18: #{tpu_custom_call.1} parent=11 // pred_check_branch
          %405 = sbr.rel (%p403) target = $region20
        $region19: #{tpu_custom_call.1} parent=11 // pred_region
          %s407 = ssub.s32 512, 512
          %408 = vsyncadd [#allocation9], %s407
          %s409 = sshll.u32 [#allocation10], 4
          %s410 = int_to_ptr.vmem [resolvable:$true] %s409
          %415 = dma.hbm_to_vmem [thread:$0]  %s4, 512, %s410, [#allocation9], 128, 128, 8
        $region20: #{tpu_custom_call.1} parent=11 // pred_fallthru
          _
        // Predicated region
        $region21: #{tpu_custom_call.1} parent=11 // pred_check
          %p416 = pneg %p176
        $region22: #{tpu_custom_call.1} parent=11 // pred_check_branch
          %418 = sbr.rel (%p416) target = $region24
        $region23: #{tpu_custom_call.1} parent=11 // pred_region
          %s420 = ssub.s32 512, 512
          %421 = vsyncadd [#allocation12], %s420
          %s422 = sshll.u32 [#allocation11], 4
          %s423 = int_to_ptr.vmem [resolvable:$true] %s422
          %428 = dma.hbm_to_vmem [thread:$0]  %s5, 512, %s423, [#allocation12], 128, 128, 8
        $region24: #{tpu_custom_call.1} parent=11 // pred_fallthru
          _
        // Predicated region
        $region25: #{tpu_custom_call.1} parent=11 // pred_check
          %p429 = pneg %p197
        $region26: #{tpu_custom_call.1} parent=11 // pred_check_branch
          %431 = sbr.rel (%p429) target = $region28
        $region27: #{tpu_custom_call.1} parent=11 // pred_region
          _
        $region28: #{tpu_custom_call.1} parent=11 // pred_fallthru
          _
        // Predicated region
        $region29: #{tpu_custom_call.1} parent=11 // pred_check
          %p432 = pneg %p218
        $region30: #{tpu_custom_call.1} parent=11 // pred_check_branch
          %434 = sbr.rel (%p432) target = $region32
        $region31: #{tpu_custom_call.1} parent=11 // pred_region
          _
        $region32: #{tpu_custom_call.1} parent=11 // pred_fallthru
          _
        // Predicated region
        $region33: #{tpu_custom_call.1} parent=11 // pred_check
          %p435 = pneg %p239
        $region34: #{tpu_custom_call.1} parent=11 // pred_check_branch
          %437 = sbr.rel (%p435) target = $region36
        $region35: #{tpu_custom_call.1} parent=11 // pred_region
          _
        $region36: #{tpu_custom_call.1} parent=11 // pred_fallthru
          _
        // Predicated region
        $region37: #{tpu_custom_call.1} parent=11 // pred_check
          %p438 = pneg %p260
        $region38: #{tpu_custom_call.1} parent=11 // pred_check_branch
          %440 = sbr.rel (%p438) target = $region40
        $region39: #{tpu_custom_call.1} parent=11 // pred_region
          %s442 = ssub.s32 512, 512
          %443 = vsyncadd [#allocation12], %s442
          %s444 = sshll.u32 [#allocation13], 4
          %s445 = int_to_ptr.vmem [resolvable:$true] %s444
          %450 = dma.hbm_to_vmem [thread:$0]  %s9, 512, %s445, [#allocation12], 128, 128, 8
        $region40: #{tpu_custom_call.1} parent=11 // pred_fallthru
          _
        // Predicated region
        $region41: #{tpu_custom_call.1} parent=11 // pred_check
          %p451 = pneg %p281
        $region42: #{tpu_custom_call.1} parent=11 // pred_check_branch
          %453 = sbr.rel (%p451) target = $region44
        $region43: #{tpu_custom_call.1} parent=11 // pred_region
          _
        $region44: #{tpu_custom_call.1} parent=11 // pred_fallthru
          _
        // Predicated region
        $region45: #{tpu_custom_call.1} parent=11 // pred_check
          %p454 = pneg %p302
        $region46: #{tpu_custom_call.1} parent=11 // pred_check_branch
          %456 = sbr.rel (%p454) target = $region48
        $region47: #{tpu_custom_call.1} parent=11 // pred_region
          _
        $region48: #{tpu_custom_call.1} parent=11 // pred_fallthru
          _
        // Predicated region
        $region49: #{tpu_custom_call.1} parent=11 // pred_check
          %p457 = pneg %p323
        $region50: #{tpu_custom_call.1} parent=11 // pred_check_branch
          %459 = sbr.rel (%p457) target = $region52
        $region51: #{tpu_custom_call.1} parent=11 // pred_region
          _
        $region52: #{tpu_custom_call.1} parent=11 // pred_fallthru
          _
      $region12: #{tpu_custom_call.1} parent=5 // pred_fallthru
        _
      %p460 = scmp.lt.s32.totalorder %s35, 2
      // Predicated region
      $region53: #{tpu_custom_call.1} parent=5 // pred_check
        %p461 = pneg %p460
      $region54: #{tpu_custom_call.1} parent=5 // pred_check_branch
        %463 = sbr.rel (%p461) target = $region56
      $region55: #{tpu_custom_call.1} parent=5 // pred_region
        // Predicated region
        $region57: #{tpu_custom_call.1} parent=55 // pred_check
          %p464 = pneg %p55
        $region58: #{tpu_custom_call.1} parent=55 // pred_check_branch
          %466 = sbr.rel (%p464) target = $region60
        $region59: #{tpu_custom_call.1} parent=55 // pred_region
          %s467 = sand.u32 %s45, 1
          %s468 = scalar_lea.sflag [#allocation3], %s467
          %s469 = sand.u32 %s45, 1
          %s470 = smul.addr %s469, 8
          %s471 = scalar_lea.vmem [#allocation2], %s470
          %s473 = ssub.s32 128, 128
          %474 = vsyncadd %s468, %s473
          %s475 = smul.addr %s35, 128
          %s476 = scalar_lea.hbm %s0, %s475
          %s478 = sshll.u32 %s471, 4
          %s479 = int_to_ptr.vmem [resolvable:$true] %s478
          %481 = dma.hbm_to_vmem [thread:$0]  %s476, 128, %s479, %s468
        $region60: #{tpu_custom_call.1} parent=55 // pred_fallthru
          _
        // Predicated region
        $region61: #{tpu_custom_call.1} parent=55 // pred_check
          %p482 = pneg %p81
        $region62: #{tpu_custom_call.1} parent=55 // pred_check_branch
          %484 = sbr.rel (%p482) target = $region64
        $region63: #{tpu_custom_call.1} parent=55 // pred_region
          %s485 = sand.u32 %s35, 1
          %s486 = scalar_lea.sflag [#allocation6], %s485
          %s487 = sand.u32 %s71, 1
          %s488 = smul.addr %s487, 8
          %s489 = scalar_lea.vmem [#allocation5], %s488
          %s491 = ssub.s32 128, 128
          %492 = vsyncadd %s486, %s491
          %s493 = smul.addr %s35, 128
          %s494 = scalar_lea.hbm %s1, %s493
          %s496 = sshll.u32 %s489, 4
          %s497 = int_to_ptr.vmem [resolvable:$true] %s496
          %499 = dma.hbm_to_vmem [thread:$0]  %s494, 128, %s497, %s486
        $region64: #{tpu_custom_call.1} parent=55 // pred_fallthru
          _
        // Predicated region
        $region65: #{tpu_custom_call.1} parent=55 // pred_check
          %p500 = pneg %p107
        $region66: #{tpu_custom_call.1} parent=55 // pred_check_branch
          %502 = sbr.rel (%p500) target = $region68
        $region67: #{tpu_custom_call.1} parent=55 // pred_region
          %s503 = sand.u32 %s35, 1
          %s504 = scalar_lea.sflag [#allocation6], %s503
          %s505 = sand.u32 %s97, 1
          %s506 = smul.addr %s505, 8
          %s507 = scalar_lea.vmem [#allocation7], %s506
          %s509 = ssub.s32 128, 128
          %510 = vsyncadd %s504, %s509
          %s511 = smul.addr %s35, 128
          %s512 = scalar_lea.hbm %s2, %s511
          %s514 = sshll.u32 %s507, 4
          %s515 = int_to_ptr.vmem [resolvable:$true] %s514
          %517 = dma.hbm_to_vmem [thread:$0]  %s512, 128, %s515, %s504
        $region68: #{tpu_custom_call.1} parent=55 // pred_fallthru
          _
      $region56: #{tpu_custom_call.1} parent=5 // pred_fallthru
        _
      %p518 = scmp.le.s32.totalorder 1, %s35
      %p519 = scmp.lt.s32.totalorder %s35, 3
      %p520 = pnand %p518, %p519
      %p521 = pneg %p520
      // Predicated region
      $region69: #{tpu_custom_call.1} parent=5 // pred_check
        _
      $region70: #{tpu_custom_call.1} parent=5 // pred_check_branch
        %523 = sbr.rel (%p520) target = $region72
      $region71: #{tpu_custom_call.1} parent=5 // pred_region
        %s524 = ssub.s32 %s35, 1
        %s525 = sand.u32 %s48, 1
        %s526 = scalar_lea.sflag [#allocation3], %s525
        %s527 = sand.u32 %s48, 1
        %s528 = smul.addr %s527, 8
        %s529 = scalar_lea.vmem [#allocation2], %s528
        // Predicated region
        $region73: #{tpu_custom_call.1} parent=71 // pred_check
          %p530 = pneg %p61
        $region74: #{tpu_custom_call.1} parent=71 // pred_check_branch
          %532 = sbr.rel (%p530) target = $region76
        $region75: #{tpu_custom_call.1} parent=71 // pred_region
          %533 = dma.done %s526, 128
        $region76: #{tpu_custom_call.1} parent=71 // pred_fallthru
          _
        %s534 = sand.u32 %s40, 1
        %s535 = scalar_lea.sflag [#allocation6], %s534
        %s536 = sand.u32 %s74, 1
        %s537 = smul.addr %s536, 8
        %s538 = scalar_lea.vmem [#allocation5], %s537
        // Predicated region
        $region77: #{tpu_custom_call.1} parent=71 // pred_check
          %p539 = pneg %p87
        $region78: #{tpu_custom_call.1} parent=71 // pred_check_branch
          %541 = sbr.rel (%p539) target = $region80
        $region79: #{tpu_custom_call.1} parent=71 // pred_region
          %542 = dma.done %s535, 128
        $region80: #{tpu_custom_call.1} parent=71 // pred_fallthru
          _
        %s543 = sand.u32 %s40, 1
        %s544 = scalar_lea.sflag [#allocation6], %s543
        %s545 = sand.u32 %s100, 1
        %s546 = smul.addr %s545, 8
        %s547 = scalar_lea.vmem [#allocation7], %s546
        // Predicated region
        $region81: #{tpu_custom_call.1} parent=71 // pred_check
          %p548 = pneg %p113
        $region82: #{tpu_custom_call.1} parent=71 // pred_check_branch
          %550 = sbr.rel (%p548) target = $region84
        $region83: #{tpu_custom_call.1} parent=71 // pred_region
          %551 = dma.done %s544, 128
        $region84: #{tpu_custom_call.1} parent=71 // pred_fallthru
          _
        // Predicated region
        $region85: #{tpu_custom_call.1} parent=71 // pred_check
          %p552 = pneg %p134
        $region86: #{tpu_custom_call.1} parent=71 // pred_check_branch
          %554 = sbr.rel (%p552) target = $region88
        $region87: #{tpu_custom_call.1} parent=71 // pred_region
          %555 = dma.done [#allocation9], 512
        $region88: #{tpu_custom_call.1} parent=71 // pred_fallthru
          _
        // Predicated region
        $region89: #{tpu_custom_call.1} parent=71 // pred_check
          %p556 = pneg %p155
        $region90: #{tpu_custom_call.1} parent=71 // pred_check_branch
          %558 = sbr.rel (%p556) target = $region92
        $region91: #{tpu_custom_call.1} parent=71 // pred_region
          %559 = dma.done [#allocation9], 512
        $region92: #{tpu_custom_call.1} parent=71 // pred_fallthru
          _
        // Predicated region
        $region93: #{tpu_custom_call.1} parent=71 // pred_check
          %p560 = pneg %p176
        $region94: #{tpu_custom_call.1} parent=71 // pred_check_branch
          %562 = sbr.rel (%p560) target = $region96
        $region95: #{tpu_custom_call.1} parent=71 // pred_region
          %563 = dma.done [#allocation12], 512
        $region96: #{tpu_custom_call.1} parent=71 // pred_fallthru
          _
        // Predicated region
        $region97: #{tpu_custom_call.1} parent=71 // pred_check
          %p564 = pneg %p260
        $region98: #{tpu_custom_call.1} parent=71 // pred_check_branch
          %566 = sbr.rel (%p564) target = $region100
        $region99: #{tpu_custom_call.1} parent=71 // pred_region
          %567 = dma.done [#allocation12], 512
        $region100: #{tpu_custom_call.1} parent=71 // pred_fallthru
          _
        %s568 = sand.u32 %s48, 1
        %s569 = scalar_lea.sflag [#allocation3], %s568
        %s570 = sand.u32 %s48, 1
        %s571 = smul.addr %s570, 8
        %s572 = scalar_lea.vmem [#allocation2], %s571
        %p573 = pneg %p61
        %p574 = pneg %p58
        %s575 = sand.u32 %s40, 1
        %s576 = scalar_lea.sflag [#allocation6], %s575
        %s577 = sand.u32 %s74, 1
        %s578 = smul.addr %s577, 8
        %s579 = scalar_lea.vmem [#allocation5], %s578
        %p580 = pneg %p87
        %p581 = pneg %p84
        %s582 = sand.u32 %s40, 1
        %s583 = scalar_lea.sflag [#allocation6], %s582
        %s584 = sand.u32 %s100, 1
        %s585 = smul.addr %s584, 8
        %s586 = scalar_lea.vmem [#allocation7], %s585
        %p587 = pneg %p113
        %p588 = pneg %p110
        %p589 = pneg %p134
        %p590 = pneg %p131
        %p591 = pneg %p155
        %p592 = pneg %p152
        %p593 = pneg %p176
        %p594 = pneg %p173
        %p595 = pneg %p197
        %p596 = pneg %p194
        %p597 = pneg %p218
        %p598 = pneg %p215
        %p599 = pneg %p239
        %p600 = pneg %p236
        %p601 = pneg %p260
        %p602 = pneg %p257
        %p603 = pneg %p281
        %p604 = pneg %p278
        %p605 = pneg %p302
        %p606 = pneg %p299
        %p607 = pneg %p323
        %p608 = pneg %p320
        %p609 = pneg %p349
        %p610 = pneg %p346
        %s611 = sand.u32 %s336, 1
        %s612 = scalar_lea.sflag [#allocation4], %s611
        %s613 = sand.u32 %s336, 1
        %s614 = smul.addr %s613, 8
        %s615 = scalar_lea.vmem [#allocation14], %s614
        %p616 = pneg %p375
        %p617 = pneg %p372
        %s618 = sand.u32 %s362, 1
        %s619 = scalar_lea.sflag [#allocation16], %s618
        %s620 = sand.u32 %s362, 1
        %s621 = smul.addr %s620, 16
        %s622 = scalar_lea.vmem [#allocation15], %s621
        %v623 = vld [vmem:[%s529] sm:$0xff]
        %v624 = vld [vmem:[%s538] sm:$0xff]
        %v625 = vld [vmem:[%s547] sm:$0xff]
        %v626 = vld [vmem:[#allocation8] sm:$0xff]
        %v627 = vld [vmem:[#allocation8 + $0x8] sm:$0xff]
        %v628 = vld [vmem:[#allocation8 + $0x10] sm:$0xff]
        %v629 = vld [vmem:[#allocation8 + $0x18] sm:$0xff]
        %v630 = vld [vmem:[%s6] sm:$0x1]
        %v632 = vlaneseq
        %v633 = vshrl.u32 %v632, 7
        %v634 = vsub.s32 0, %v633
        %v635 = vrot.slane %v630, %v634
        %vm637 = vcmask 261120
        %v639 = vsel %vm637, %v623, 0
        %641 = vmatprep.subr.mxu0 0.0
        %642 = vmatpush1.msra.mxu0 0.0
        %643 = vmatprep.subr.mxu0 0.0
        %644 = vmatpush1.msra.mxu0 0.0
        %645 = vmatprep.subr.mxu0 0.0
        %646 = vmatpush1.msra.mxu0 0.0
        %647 = vmatprep.subr.mxu0 0.0
        %648 = vmatpush1.msra.mxu0 0.0
        %649 = vmatprep.subr.mxu0 0.0
        %650 = vmatpush1.msra.mxu0 0.0
        %651 = vmatprep.subr.mxu0 0.0
        %652 = vmatpush1.msra.mxu0 0.0
        %653 = vmatprep.subr.mxu0 0.0
        %654 = vmatpush1.msra.mxu0 0.0
        %655 = vmatprep.subr.mxu0 0.0
        %656 = vmatpush1.msra.mxu0 0.0
        %657 = vmatprep.subr.mxu0 0.0
        %658 = vmatpush1.msra.mxu0 0.0
        %659 = vmatprep.subr.mxu0 0.0
        %660 = vmatpush1.msra.mxu0 0.0
        %661 = vmatprep.subr.mxu0 0.0
        %662 = vmatpush1.msra.mxu0 0.0
        %663 = vmatprep.subr.mxu0 0.0
        %664 = vmatpush1.msra.mxu0 0.0
        %665 = vmatprep.subr.mxu0 0.0
        %666 = vmatpush1.msra.mxu0 %v629
        %667 = vmatprep.subr.mxu0 0.0
        %668 = vmatpush1.msra.mxu0 %v628
        %669 = vmatprep.subr.mxu0 0.0
        %670 = vmatpush1.msra.mxu0 %v627
        %671 = vmatprep.subr.mxu0 0.0
        %672 = vmatpush1.msra.mxu0 %v626
        %673 = vmatprep.subr.mxu0 0.0
        %674 = vmatpush2.msra.mxu0 0.0
        %675 = vmatprep.subr.mxu0 0.0
        %676 = vmatpush2.msra.mxu0 0.0
        %677 = vmatprep.subr.mxu0 0.0
        %678 = vmatpush2.msra.mxu0 0.0
        %679 = vmatprep.subr.mxu0 0.0
        %680 = vmatpush2.msra.mxu0 0.0
        %681 = vmatprep.subr.mxu0 0.0
        %682 = vmatpush2.msra.mxu0 0.0
        %683 = vmatprep.subr.mxu0 0.0
        %684 = vmatpush2.msra.mxu0 0.0
        %685 = vmatprep.subr.mxu0 0.0
        %686 = vmatpush2.msra.mxu0 0.0
        %687 = vmatprep.subr.mxu0 0.0
        %688 = vmatpush2.msra.mxu0 0.0
        %689 = vmatprep.subr.mxu0 0.0
        %690 = vmatpush2.msra.mxu0 0.0
        %691 = vmatprep.subr.mxu0 0.0
        %692 = vmatpush2.msra.mxu0 0.0
        %693 = vmatprep.subr.mxu0 0.0
        %694 = vmatpush2.msra.mxu0 0.0
        %695 = vmatprep.subr.mxu0 0.0
        %696 = vmatpush2.msra.mxu0 0.0
        %697 = vmatprep.subr.mxu0 0.0
        %698 = vmatpush2.msra.mxu0 0.0
        %699 = vmatprep.subr.mxu0 0.0
        %700 = vmatpush2.msra.mxu0 0.0
        %701 = vmatprep.subr.mxu0 0.0
        %702 = vmatpush2.msra.mxu0 0.0
        %703 = vmatprep.subr.mxu0 0.0
        %704 = vmatpush2.msra.mxu0 0.0
        %705 = vmatprep.mubr.f32.mxu0 0.0
        %706 = vmatmul.mubr.f32.gmra.mxu0 %v639
        %v707 = vpop.f32.mrf.mxu0
        %v708 = vadd.f32 %v635, %v707
        %v709 = vpop.f32.mrf.mxu0
        %710 = vdwg.mxu0
        %v711 = vld [vmem:[#allocation10] sm:$0xff]
        %v712 = vld [vmem:[#allocation10 + $0x8] sm:$0xff]
        %v713 = vld [vmem:[#allocation10 + $0x10] sm:$0xff]
        %v714 = vld [vmem:[#allocation10 + $0x18] sm:$0xff]
        %v715 = vld [vmem:[%s7] sm:$0x1]
        %v717 = vlaneseq
        %v718 = vshrl.u32 %v717, 7
        %v719 = vsub.s32 0, %v718
        %v720 = vrot.slane %v715, %v719
        %v723 = vsel %vm637, %v624, 0
        %725 = vmatprep.subr.mxu0 0.0
        %726 = vmatpush1.msra.mxu0 0.0
        %727 = vmatprep.subr.mxu0 0.0
        %728 = vmatpush1.msra.mxu0 0.0
        %729 = vmatprep.subr.mxu0 0.0
        %730 = vmatpush1.msra.mxu0 0.0
        %731 = vmatprep.subr.mxu0 0.0
        %732 = vmatpush1.msra.mxu0 0.0
        %733 = vmatprep.subr.mxu0 0.0
        %734 = vmatpush1.msra.mxu0 0.0
        %735 = vmatprep.subr.mxu0 0.0
        %736 = vmatpush1.msra.mxu0 0.0
        %737 = vmatprep.subr.mxu0 0.0
        %738 = vmatpush1.msra.mxu0 0.0
        %739 = vmatprep.subr.mxu0 0.0
        %740 = vmatpush1.msra.mxu0 0.0
        %741 = vmatprep.subr.mxu0 0.0
        %742 = vmatpush1.msra.mxu0 0.0
        %743 = vmatprep.subr.mxu0 0.0
        %744 = vmatpush1.msra.mxu0 0.0
        %745 = vmatprep.subr.mxu0 0.0
        %746 = vmatpush1.msra.mxu0 0.0
        %747 = vmatprep.subr.mxu0 0.0
        %748 = vmatpush1.msra.mxu0 0.0
        %749 = vmatprep.subr.mxu0 0.0
        %750 = vmatpush1.msra.mxu0 %v714
        %751 = vmatprep.subr.mxu0 0.0
        %752 = vmatpush1.msra.mxu0 %v713
        %753 = vmatprep.subr.mxu0 0.0
        %754 = vmatpush1.msra.mxu0 %v712
        %755 = vmatprep.subr.mxu0 0.0
        %756 = vmatpush1.msra.mxu0 %v711
        %757 = vmatprep.subr.mxu0 0.0
        %758 = vmatpush2.msra.mxu0 0.0
        %759 = vmatprep.subr.mxu0 0.0
        %760 = vmatpush2.msra.mxu0 0.0
        %761 = vmatprep.subr.mxu0 0.0
        %762 = vmatpush2.msra.mxu0 0.0
        %763 = vmatprep.subr.mxu0 0.0
        %764 = vmatpush2.msra.mxu0 0.0
        %765 = vmatprep.subr.mxu0 0.0
        %766 = vmatpush2.msra.mxu0 0.0
        %767 = vmatprep.subr.mxu0 0.0
        %768 = vmatpush2.msra.mxu0 0.0
        %769 = vmatprep.subr.mxu0 0.0
        %770 = vmatpush2.msra.mxu0 0.0
        %771 = vmatprep.subr.mxu0 0.0
        %772 = vmatpush2.msra.mxu0 0.0
        %773 = vmatprep.subr.mxu0 0.0
        %774 = vmatpush2.msra.mxu0 0.0
        %775 = vmatprep.subr.mxu0 0.0
        %776 = vmatpush2.msra.mxu0 0.0
        %777 = vmatprep.subr.mxu0 0.0
        %778 = vmatpush2.msra.mxu0 0.0
        %779 = vmatprep.subr.mxu0 0.0
        %780 = vmatpush2.msra.mxu0 0.0
        %781 = vmatprep.subr.mxu0 0.0
        %782 = vmatpush2.msra.mxu0 0.0
        %783 = vmatprep.subr.mxu0 0.0
        %784 = vmatpush2.msra.mxu0 0.0
        %785 = vmatprep.subr.mxu0 0.0
        %786 = vmatpush2.msra.mxu0 0.0
        %787 = vmatprep.subr.mxu0 0.0
        %788 = vmatpush2.msra.mxu0 0.0
        %789 = vmatprep.mubr.f32.mxu0 0.0
        %790 = vmatmul.mubr.f32.gmra.mxu0 %v723
        %v791 = vpop.f32.mrf.mxu0
        %v792 = vadd.f32 %v720, %v791
        %v793 = vpop.f32.mrf.mxu0
        %794 = vdwg.mxu0
        %v795 = vld [vmem:[#allocation11] sm:$0xff]
        %v796 = vld [vmem:[#allocation11 + $0x8] sm:$0xff]
        %v797 = vld [vmem:[#allocation11 + $0x10] sm:$0xff]
        %v798 = vld [vmem:[#allocation11 + $0x18] sm:$0xff]
        %v799 = vld [vmem:[%s8] sm:$0x1]
        %v801 = vlaneseq
        %v802 = vshrl.u32 %v801, 7
        %v803 = vsub.s32 0, %v802
        %v804 = vrot.slane %v799, %v803
        %v807 = vsel %vm637, %v625, 0
        %809 = vmatprep.subr.mxu0 0.0
        %810 = vmatpush1.msra.mxu0 0.0
        %811 = vmatprep.subr.mxu0 0.0
        %812 = vmatpush1.msra.mxu0 0.0
        %813 = vmatprep.subr.mxu0 0.0
        %814 = vmatpush1.msra.mxu0 0.0
        %815 = vmatprep.subr.mxu0 0.0
        %816 = vmatpush1.msra.mxu0 0.0
        %817 = vmatprep.subr.mxu0 0.0
        %818 = vmatpush1.msra.mxu0 0.0
        %819 = vmatprep.subr.mxu0 0.0
        %820 = vmatpush1.msra.mxu0 0.0
        %821 = vmatprep.subr.mxu0 0.0
        %822 = vmatpush1.msra.mxu0 0.0
        %823 = vmatprep.subr.mxu0 0.0
        %824 = vmatpush1.msra.mxu0 0.0
        %825 = vmatprep.subr.mxu0 0.0
        %826 = vmatpush1.msra.mxu0 0.0
        %827 = vmatprep.subr.mxu0 0.0
        %828 = vmatpush1.msra.mxu0 0.0
        %829 = vmatprep.subr.mxu0 0.0
        %830 = vmatpush1.msra.mxu0 0.0
        %831 = vmatprep.subr.mxu0 0.0
        %832 = vmatpush1.msra.mxu0 0.0
        %833 = vmatprep.subr.mxu0 0.0
        %834 = vmatpush1.msra.mxu0 %v798
        %835 = vmatprep.subr.mxu0 0.0
        %836 = vmatpush1.msra.mxu0 %v797
        %837 = vmatprep.subr.mxu0 0.0
        %838 = vmatpush1.msra.mxu0 %v796
        %839 = vmatprep.subr.mxu0 0.0
        %840 = vmatpush1.msra.mxu0 %v795
        %841 = vmatprep.subr.mxu0 0.0
        %842 = vmatpush2.msra.mxu0 0.0
        %843 = vmatprep.subr.mxu0 0.0
        %844 = vmatpush2.msra.mxu0 0.0
        %845 = vmatprep.subr.mxu0 0.0
        %846 = vmatpush2.msra.mxu0 0.0
        %847 = vmatprep.subr.mxu0 0.0
        %848 = vmatpush2.msra.mxu0 0.0
        %849 = vmatprep.subr.mxu0 0.0
        %850 = vmatpush2.msra.mxu0 0.0
        %851 = vmatprep.subr.mxu0 0.0
        %852 = vmatpush2.msra.mxu0 0.0
        %853 = vmatprep.subr.mxu0 0.0
        %854 = vmatpush2.msra.mxu0 0.0
        %855 = vmatprep.subr.mxu0 0.0
        %856 = vmatpush2.msra.mxu0 0.0
        %857 = vmatprep.subr.mxu0 0.0
        %858 = vmatpush2.msra.mxu0 0.0
        %859 = vmatprep.subr.mxu0 0.0
        %860 = vmatpush2.msra.mxu0 0.0
        %861 = vmatprep.subr.mxu0 0.0
        %862 = vmatpush2.msra.mxu0 0.0
        %863 = vmatprep.subr.mxu0 0.0
        %864 = vmatpush2.msra.mxu0 0.0
        %865 = vmatprep.subr.mxu0 0.0
        %866 = vmatpush2.msra.mxu0 0.0
        %867 = vmatprep.subr.mxu0 0.0
        %868 = vmatpush2.msra.mxu0 0.0
        %869 = vmatprep.subr.mxu0 0.0
        %870 = vmatpush2.msra.mxu0 0.0
        %871 = vmatprep.subr.mxu0 0.0
        %872 = vmatpush2.msra.mxu0 0.0
        %873 = vmatprep.mubr.f32.mxu0 0.0
        %874 = vmatmul.mubr.f32.gmra.mxu0 %v807
        %v875 = vpop.f32.mrf.mxu0
        %v876 = vadd.f32 %v804, %v875
        %v877 = vpop.f32.mrf.mxu0
        %878 = vdwg.mxu0
        %v879 = vld [vmem:[#allocation13] sm:$0xff]
        %v880 = vld [vmem:[#allocation13 + $0x8] sm:$0xff]
        %v881 = vld [vmem:[#allocation13 + $0x10] sm:$0xff]
        %v882 = vld [vmem:[#allocation13 + $0x18] sm:$0xff]
        %v883 = vld [vmem:[%s10] sm:$0x1]
        %v885 = vlaneseq
        %v886 = vshrl.u32 %v885, 7
        %v887 = vsub.s32 0, %v886
        %v888 = vrot.slane %v883, %v887
        %v890 = vadd.f32 %v623, %v888
        %vm891 = vcmask 130048
        %v893 = vsel %vm891, %v708, 0
        %v896 = vsel %vm891, %v792, 0
        %898 = vmatprep.subr.mxu0 0.0
        %899 = vmatpush1.xpose.msra.mxu0 0.0
        %900 = vmatprep.subr.mxu0 0.0
        %901 = vmatpush1.xpose.msra.mxu0 0.0
        %902 = vmatprep.subr.mxu0 0.0
        %903 = vmatpush1.xpose.msra.mxu0 0.0
        %904 = vmatprep.subr.mxu0 0.0
        %905 = vmatpush1.xpose.msra.mxu0 0.0
        %906 = vmatprep.subr.mxu0 0.0
        %907 = vmatpush1.xpose.msra.mxu0 0.0
        %908 = vmatprep.subr.mxu0 0.0
        %909 = vmatpush1.xpose.msra.mxu0 0.0
        %910 = vmatprep.subr.mxu0 0.0
        %911 = vmatpush1.xpose.msra.mxu0 0.0
        %912 = vmatprep.subr.mxu0 0.0
        %913 = vmatpush1.xpose.msra.mxu0 0.0
        %914 = vmatprep.subr.mxu0 0.0
        %915 = vmatpush1.xpose.msra.mxu0 0.0
        %916 = vmatprep.subr.mxu0 0.0
        %917 = vmatpush1.xpose.msra.mxu0 0.0
        %918 = vmatprep.subr.mxu0 0.0
        %919 = vmatpush1.xpose.msra.mxu0 0.0
        %920 = vmatprep.subr.mxu0 0.0
        %921 = vmatpush1.xpose.msra.mxu0 0.0
        %922 = vmatprep.subr.mxu0 0.0
        %923 = vmatpush1.xpose.msra.mxu0 0.0
        %924 = vmatprep.subr.mxu0 0.0
        %925 = vmatpush1.xpose.msra.mxu0 0.0
        %926 = vmatprep.subr.mxu0 0.0
        %927 = vmatpush1.xpose.msra.mxu0 0.0
        %928 = vmatprep.subr.mxu0 0.0
        %929 = vmatpush1.xpose.msra.mxu0 %v896
        %930 = vmatprep.subr.mxu0 0.0
        %931 = vmatpush2.xpose.msra.mxu0 0.0
        %932 = vmatprep.subr.mxu0 0.0
        %933 = vmatpush2.xpose.msra.mxu0 0.0
        %934 = vmatprep.subr.mxu0 0.0
        %935 = vmatpush2.xpose.msra.mxu0 0.0
        %936 = vmatprep.subr.mxu0 0.0
        %937 = vmatpush2.xpose.msra.mxu0 0.0
        %938 = vmatprep.subr.mxu0 0.0
        %939 = vmatpush2.xpose.msra.mxu0 0.0
        %940 = vmatprep.subr.mxu0 0.0
        %941 = vmatpush2.xpose.msra.mxu0 0.0
        %942 = vmatprep.subr.mxu0 0.0
        %943 = vmatpush2.xpose.msra.mxu0 0.0
        %944 = vmatprep.subr.mxu0 0.0
        %945 = vmatpush2.xpose.msra.mxu0 0.0
        %946 = vmatprep.subr.mxu0 0.0
        %947 = vmatpush2.xpose.msra.mxu0 0.0
        %948 = vmatprep.subr.mxu0 0.0
        %949 = vmatpush2.xpose.msra.mxu0 0.0
        %950 = vmatprep.subr.mxu0 0.0
        %951 = vmatpush2.xpose.msra.mxu0 0.0
        %952 = vmatprep.subr.mxu0 0.0
        %953 = vmatpush2.xpose.msra.mxu0 0.0
        %954 = vmatprep.subr.mxu0 0.0
        %955 = vmatpush2.xpose.msra.mxu0 0.0
        %956 = vmatprep.subr.mxu0 0.0
        %957 = vmatpush2.xpose.msra.mxu0 0.0
        %958 = vmatprep.subr.mxu0 0.0
        %959 = vmatpush2.xpose.msra.mxu0 0.0
        %960 = vmatprep.subr.mxu0 0.0
        %961 = vmatpush2.xpose.msra.mxu0 0.0
        %962 = vmatprep.mubr.f32.mxu0 0.0
        %963 = vmatmul.mubr.f32.gmra.mxu0 %v893
        %v964 = vpop.f32.mrf.mxu0
        %v965 = vadd.f32 0.0, %v964
        %v966 = vpop.f32.mrf.mxu0
        %967 = vdwg.mxu0
        %v968 = vmul.f32 %v965, 0.25
        %vm969 = vcmask 64512
        %v970 = vsel %vm969, %v968, -inf
        %971 = vmax.xlane.f32.xlu0 %v970
        %v972 = vpop.xlane.xlu0 %971
        %v973 = vsub.f32 %v968, %v972
        %v974 = vmul.f32 %v973, 1.442695
        %v975 = vpow.pop %v974
        %v976 = vsel %vm969, %v975, 0.0
        %977 = vadd.xlane.f32.xlu0 %v976
        %v978 = vpop.xlane.xlu0 %977
        %v979 = vrcp.pop %v978
        %v980 = vmul.f32 %v975, %v979
        %981 = vst.msk [vmem:[%s622] sm:$0xff] %vm969, %v980
        %v983 = vsel %vm969, %v980, 0
        %985 = vmatprep.subr.mxu0 0.0
        %986 = vmatpush1.msra.mxu0 0.0
        %987 = vmatprep.subr.mxu0 0.0
        %988 = vmatpush1.msra.mxu0 0.0
        %989 = vmatprep.subr.mxu0 0.0
        %990 = vmatpush1.msra.mxu0 0.0
        %991 = vmatprep.subr.mxu0 0.0
        %992 = vmatpush1.msra.mxu0 0.0
        %993 = vmatprep.subr.mxu0 0.0
        %994 = vmatpush1.msra.mxu0 0.0
        %995 = vmatprep.subr.mxu0 0.0
        %996 = vmatpush1.msra.mxu0 0.0
        %997 = vmatprep.subr.mxu0 0.0
        %998 = vmatpush1.msra.mxu0 0.0
        %999 = vmatprep.subr.mxu0 0.0
        %1000 = vmatpush1.msra.mxu0 0.0
        %1001 = vmatprep.subr.mxu0 0.0
        %1002 = vmatpush1.msra.mxu0 0.0
        %1003 = vmatprep.subr.mxu0 0.0
        %1004 = vmatpush1.msra.mxu0 0.0
        %1005 = vmatprep.subr.mxu0 0.0
        %1006 = vmatpush1.msra.mxu0 0.0
        %1007 = vmatprep.subr.mxu0 0.0
        %1008 = vmatpush1.msra.mxu0 0.0
        %1009 = vmatprep.subr.mxu0 0.0
        %1010 = vmatpush1.msra.mxu0 0.0
        %1011 = vmatprep.subr.mxu0 0.0
        %1012 = vmatpush1.msra.mxu0 0.0
        %1013 = vmatprep.subr.mxu0 0.0
        %1014 = vmatpush1.msra.mxu0 0.0
        %1015 = vmatprep.subr.mxu0 0.0
        %1016 = vmatpush1.msra.mxu0 %v876
        %1017 = vmatprep.subr.mxu0 0.0
        %1018 = vmatpush2.msra.mxu0 0.0
        %1019 = vmatprep.subr.mxu0 0.0
        %1020 = vmatpush2.msra.mxu0 0.0
        %1021 = vmatprep.subr.mxu0 0.0
        %1022 = vmatpush2.msra.mxu0 0.0
        %1023 = vmatprep.subr.mxu0 0.0
        %1024 = vmatpush2.msra.mxu0 0.0
        %1025 = vmatprep.subr.mxu0 0.0
        %1026 = vmatpush2.msra.mxu0 0.0
        %1027 = vmatprep.subr.mxu0 0.0
        %1028 = vmatpush2.msra.mxu0 0.0
        %1029 = vmatprep.subr.mxu0 0.0
        %1030 = vmatpush2.msra.mxu0 0.0
        %1031 = vmatprep.subr.mxu0 0.0
        %1032 = vmatpush2.msra.mxu0 0.0
        %1033 = vmatprep.subr.mxu0 0.0
        %1034 = vmatpush2.msra.mxu0 0.0
        %1035 = vmatprep.subr.mxu0 0.0
        %1036 = vmatpush2.msra.mxu0 0.0
        %1037 = vmatprep.subr.mxu0 0.0
        %1038 = vmatpush2.msra.mxu0 0.0
        %1039 = vmatprep.subr.mxu0 0.0
        %1040 = vmatpush2.msra.mxu0 0.0
        %1041 = vmatprep.subr.mxu0 0.0
        %1042 = vmatpush2.msra.mxu0 0.0
        %1043 = vmatprep.subr.mxu0 0.0
        %1044 = vmatpush2.msra.mxu0 0.0
        %1045 = vmatprep.subr.mxu0 0.0
        %1046 = vmatpush2.msra.mxu0 0.0
        %1047 = vmatprep.subr.mxu0 0.0
        %1048 = vmatpush2.msra.mxu0 0.0
        %1049 = vmatprep.mubr.f32.mxu0 0.0
        %1050 = vmatmul.mubr.f32.gmra.mxu0 %v983
        %v1051 = vpop.f32.mrf.mxu0
        %v1052 = vadd.f32 0.0, %v1051
        %v1053 = vpop.f32.mrf.mxu0
        %1054 = vdwg.mxu0
        %v1056 = vsel %vm891, %v1052, 0
        %1058 = vmatprep.subr.mxu0 0.0
        %1059 = vmatpush1.msra.mxu0 0.0
        %1060 = vmatprep.subr.mxu0 0.0
        %1061 = vmatpush1.msra.mxu0 0.0
        %1062 = vmatprep.subr.mxu0 0.0
        %1063 = vmatpush1.msra.mxu0 0.0
        %1064 = vmatprep.subr.mxu0 0.0
        %1065 = vmatpush1.msra.mxu0 0.0
        %1066 = vmatprep.subr.mxu0 0.0
        %1067 = vmatpush1.msra.mxu0 0.0
        %1068 = vmatprep.subr.mxu0 0.0
        %1069 = vmatpush1.msra.mxu0 0.0
        %1070 = vmatprep.subr.mxu0 0.0
        %1071 = vmatpush1.msra.mxu0 0.0
        %1072 = vmatprep.subr.mxu0 0.0
        %1073 = vmatpush1.msra.mxu0 0.0
        %1074 = vmatprep.subr.mxu0 0.0
        %1075 = vmatpush1.msra.mxu0 0.0
        %1076 = vmatprep.subr.mxu0 0.0
        %1077 = vmatpush1.msra.mxu0 0.0
        %1078 = vmatprep.subr.mxu0 0.0
        %1079 = vmatpush1.msra.mxu0 0.0
        %1080 = vmatprep.subr.mxu0 0.0
        %1081 = vmatpush1.msra.mxu0 0.0
        %1082 = vmatprep.subr.mxu0 0.0
        %1083 = vmatpush1.msra.mxu0 0.0
        %1084 = vmatprep.subr.mxu0 0.0
        %1085 = vmatpush1.msra.mxu0 0.0
        %1086 = vmatprep.subr.mxu0 0.0
        %1087 = vmatpush1.msra.mxu0 %v880
        %1088 = vmatprep.subr.mxu0 0.0
        %1089 = vmatpush1.msra.mxu0 %v879
        %1090 = vmatprep.subr.mxu0 0.0
        %1091 = vmatpush2.msra.mxu0 0.0
        %1092 = vmatprep.subr.mxu0 0.0
        %1093 = vmatpush2.msra.mxu0 0.0
        %1094 = vmatprep.subr.mxu0 0.0
        %1095 = vmatpush2.msra.mxu0 0.0
        %1096 = vmatprep.subr.mxu0 0.0
        %1097 = vmatpush2.msra.mxu0 0.0
        %1098 = vmatprep.subr.mxu0 0.0
        %1099 = vmatpush2.msra.mxu0 0.0
        %1100 = vmatprep.subr.mxu0 0.0
        %1101 = vmatpush2.msra.mxu0 0.0
        %1102 = vmatprep.subr.mxu0 0.0
        %1103 = vmatpush2.msra.mxu0 0.0
        %1104 = vmatprep.subr.mxu0 0.0
        %1105 = vmatpush2.msra.mxu0 0.0
        %1106 = vmatprep.subr.mxu0 0.0
        %1107 = vmatpush2.msra.mxu0 0.0
        %1108 = vmatprep.subr.mxu0 0.0
        %1109 = vmatpush2.msra.mxu0 0.0
        %1110 = vmatprep.subr.mxu0 0.0
        %1111 = vmatpush2.msra.mxu0 0.0
        %1112 = vmatprep.subr.mxu0 0.0
        %1113 = vmatpush2.msra.mxu0 0.0
        %1114 = vmatprep.subr.mxu0 0.0
        %1115 = vmatpush2.msra.mxu0 0.0
        %1116 = vmatprep.subr.mxu0 0.0
        %1117 = vmatpush2.msra.mxu0 0.0
        %1118 = vmatprep.subr.mxu0 0.0
        %1119 = vmatpush2.msra.mxu0 0.0
        %1120 = vmatprep.subr.mxu0 0.0
        %1121 = vmatpush2.msra.mxu0 0.0
        %1122 = vmatprep.mubr.f32.mxu0 0.0
        %1123 = vmatmul.mubr.f32.gmra.mxu0 %v1056
        %v1124 = vpop.f32.mrf.mxu0
        %v1125 = vadd.f32 0.0, %v1124
        %v1126 = vpop.f32.mrf.mxu0
        %1127 = vdwg.mxu0
        %v1128 = vadd.f32 %v890, %v1125
        %1129 = vrot.lane.b32.xlu0 %v708, 112
        %v1130 = vpop.permute.xlu0 %1129
        %1131 = vrot.lane.b32.xlu0 %v792, 112
        %v1132 = vpop.permute.xlu0 %1131
        %v1133 = vsel %vm891, %v1130, 0
        %v1135 = vsel %vm891, %v1132, 0
        %1137 = vmatprep.subr.mxu0 0.0
        %1138 = vmatpush1.xpose.msra.mxu0 0.0
        %1139 = vmatprep.subr.mxu0 0.0
        %1140 = vmatpush1.xpose.msra.mxu0 0.0
        %1141 = vmatprep.subr.mxu0 0.0
        %1142 = vmatpush1.xpose.msra.mxu0 0.0
        %1143 = vmatprep.subr.mxu0 0.0
        %1144 = vmatpush1.xpose.msra.mxu0 0.0
        %1145 = vmatprep.subr.mxu0 0.0
        %1146 = vmatpush1.xpose.msra.mxu0 0.0
        %1147 = vmatprep.subr.mxu0 0.0
        %1148 = vmatpush1.xpose.msra.mxu0 0.0
        %1149 = vmatprep.subr.mxu0 0.0
        %1150 = vmatpush1.xpose.msra.mxu0 0.0
        %1151 = vmatprep.subr.mxu0 0.0
        %1152 = vmatpush1.xpose.msra.mxu0 0.0
        %1153 = vmatprep.subr.mxu0 0.0
        %1154 = vmatpush1.xpose.msra.mxu0 0.0
        %1155 = vmatprep.subr.mxu0 0.0
        %1156 = vmatpush1.xpose.msra.mxu0 0.0
        %1157 = vmatprep.subr.mxu0 0.0
        %1158 = vmatpush1.xpose.msra.mxu0 0.0
        %1159 = vmatprep.subr.mxu0 0.0
        %1160 = vmatpush1.xpose.msra.mxu0 0.0
        %1161 = vmatprep.subr.mxu0 0.0
        %1162 = vmatpush1.xpose.msra.mxu0 0.0
        %1163 = vmatprep.subr.mxu0 0.0
        %1164 = vmatpush1.xpose.msra.mxu0 0.0
        %1165 = vmatprep.subr.mxu0 0.0
        %1166 = vmatpush1.xpose.msra.mxu0 0.0
        %1167 = vmatprep.subr.mxu0 0.0
        %1168 = vmatpush1.xpose.msra.mxu0 %v1135
        %1169 = vmatprep.subr.mxu0 0.0
        %1170 = vmatpush2.xpose.msra.mxu0 0.0
        %1171 = vmatprep.subr.mxu0 0.0
        %1172 = vmatpush2.xpose.msra.mxu0 0.0
        %1173 = vmatprep.subr.mxu0 0.0
        %1174 = vmatpush2.xpose.msra.mxu0 0.0
        %1175 = vmatprep.subr.mxu0 0.0
        %1176 = vmatpush2.xpose.msra.mxu0 0.0
        %1177 = vmatprep.subr.mxu0 0.0
        %1178 = vmatpush2.xpose.msra.mxu0 0.0
        %1179 = vmatprep.subr.mxu0 0.0
        %1180 = vmatpush2.xpose.msra.mxu0 0.0
        %1181 = vmatprep.subr.mxu0 0.0
        %1182 = vmatpush2.xpose.msra.mxu0 0.0
        %1183 = vmatprep.subr.mxu0 0.0
        %1184 = vmatpush2.xpose.msra.mxu0 0.0
        %1185 = vmatprep.subr.mxu0 0.0
        %1186 = vmatpush2.xpose.msra.mxu0 0.0
        %1187 = vmatprep.subr.mxu0 0.0
        %1188 = vmatpush2.xpose.msra.mxu0 0.0
        %1189 = vmatprep.subr.mxu0 0.0
        %1190 = vmatpush2.xpose.msra.mxu0 0.0
        %1191 = vmatprep.subr.mxu0 0.0
        %1192 = vmatpush2.xpose.msra.mxu0 0.0
        %1193 = vmatprep.subr.mxu0 0.0
        %1194 = vmatpush2.xpose.msra.mxu0 0.0
        %1195 = vmatprep.subr.mxu0 0.0
        %1196 = vmatpush2.xpose.msra.mxu0 0.0
        %1197 = vmatprep.subr.mxu0 0.0
        %1198 = vmatpush2.xpose.msra.mxu0 0.0
        %1199 = vmatprep.subr.mxu0 0.0
        %1200 = vmatpush2.xpose.msra.mxu0 0.0
        %1201 = vmatprep.mubr.f32.mxu0 0.0
        %1202 = vmatmul.mubr.f32.gmra.mxu0 %v1133
        %v1203 = vpop.f32.mrf.mxu0
        %v1204 = vadd.f32 0.0, %v1203
        %v1205 = vpop.f32.mrf.mxu0
        %1206 = vdwg.mxu0
        %v1207 = vmul.f32 %v1204, 0.25
        %v1208 = vsel %vm969, %v1207, -inf
        %1209 = vmax.xlane.f32.xlu0 %v1208
        %v1210 = vpop.xlane.xlu0 %1209
        %v1211 = vsub.f32 %v1207, %v1210
        %v1212 = vmul.f32 %v1211, 1.442695
        %v1213 = vpow.pop %v1212
        %v1214 = vsel %vm969, %v1213, 0.0
        %1215 = vadd.xlane.f32.xlu0 %v1214
        %v1216 = vpop.xlane.xlu0 %1215
        %v1217 = vrcp.pop %v1216
        %v1218 = vmul.f32 %v1213, %v1217
        %s1219 = scalar_lea.vmem %s622, 8 [#allocation15]
        %1220 = vst.msk [vmem:[%s1219] sm:$0xff] %vm969, %v1218
        %1222 = vrot.lane.b32.xlu0 %v876, 112
        %v1223 = vpop.permute.xlu0 %1222
        %v1226 = vsel %vm969, %v1218, 0
        %1228 = vmatprep.subr.mxu0 0.0
        %1229 = vmatpush1.msra.mxu0 0.0
        %1230 = vmatprep.subr.mxu0 0.0
        %1231 = vmatpush1.msra.mxu0 0.0
        %1232 = vmatprep.subr.mxu0 0.0
        %1233 = vmatpush1.msra.mxu0 0.0
        %1234 = vmatprep.subr.mxu0 0.0
        %1235 = vmatpush1.msra.mxu0 0.0
        %1236 = vmatprep.subr.mxu0 0.0
        %1237 = vmatpush1.msra.mxu0 0.0
        %1238 = vmatprep.subr.mxu0 0.0
        %1239 = vmatpush1.msra.mxu0 0.0
        %1240 = vmatprep.subr.mxu0 0.0
        %1241 = vmatpush1.msra.mxu0 0.0
        %1242 = vmatprep.subr.mxu0 0.0
        %1243 = vmatpush1.msra.mxu0 0.0
        %1244 = vmatprep.subr.mxu0 0.0
        %1245 = vmatpush1.msra.mxu0 0.0
        %1246 = vmatprep.subr.mxu0 0.0
        %1247 = vmatpush1.msra.mxu0 0.0
        %1248 = vmatprep.subr.mxu0 0.0
        %1249 = vmatpush1.msra.mxu0 0.0
        %1250 = vmatprep.subr.mxu0 0.0
        %1251 = vmatpush1.msra.mxu0 0.0
        %1252 = vmatprep.subr.mxu0 0.0
        %1253 = vmatpush1.msra.mxu0 0.0
        %1254 = vmatprep.subr.mxu0 0.0
        %1255 = vmatpush1.msra.mxu0 0.0
        %1256 = vmatprep.subr.mxu0 0.0
        %1257 = vmatpush1.msra.mxu0 0.0
        %1258 = vmatprep.subr.mxu0 0.0
        %1259 = vmatpush1.msra.mxu0 %v1223
        %1260 = vmatprep.subr.mxu0 0.0
        %1261 = vmatpush2.msra.mxu0 0.0
        %1262 = vmatprep.subr.mxu0 0.0
        %1263 = vmatpush2.msra.mxu0 0.0
        %1264 = vmatprep.subr.mxu0 0.0
        %1265 = vmatpush2.msra.mxu0 0.0
        %1266 = vmatprep.subr.mxu0 0.0
        %1267 = vmatpush2.msra.mxu0 0.0
        %1268 = vmatprep.subr.mxu0 0.0
        %1269 = vmatpush2.msra.mxu0 0.0
        %1270 = vmatprep.subr.mxu0 0.0
        %1271 = vmatpush2.msra.mxu0 0.0
        %1272 = vmatprep.subr.mxu0 0.0
        %1273 = vmatpush2.msra.mxu0 0.0
        %1274 = vmatprep.subr.mxu0 0.0
        %1275 = vmatpush2.msra.mxu0 0.0
        %1276 = vmatprep.subr.mxu0 0.0
        %1277 = vmatpush2.msra.mxu0 0.0
        %1278 = vmatprep.subr.mxu0 0.0
        %1279 = vmatpush2.msra.mxu0 0.0
        %1280 = vmatprep.subr.mxu0 0.0
        %1281 = vmatpush2.msra.mxu0 0.0
        %1282 = vmatprep.subr.mxu0 0.0
        %1283 = vmatpush2.msra.mxu0 0.0
        %1284 = vmatprep.subr.mxu0 0.0
        %1285 = vmatpush2.msra.mxu0 0.0
        %1286 = vmatprep.subr.mxu0 0.0
        %1287 = vmatpush2.msra.mxu0 0.0
        %1288 = vmatprep.subr.mxu0 0.0
        %1289 = vmatpush2.msra.mxu0 0.0
        %1290 = vmatprep.subr.mxu0 0.0
        %1291 = vmatpush2.msra.mxu0 0.0
        %1292 = vmatprep.mubr.f32.mxu0 0.0
        %1293 = vmatmul.mubr.f32.gmra.mxu0 %v1226
        %v1294 = vpop.f32.mrf.mxu0
        %v1295 = vadd.f32 0.0, %v1294
        %v1296 = vpop.f32.mrf.mxu0
        %1297 = vdwg.mxu0
        %v1299 = vsel %vm891, %v1295, 0
        %1301 = vmatprep.subr.mxu0 0.0
        %1302 = vmatpush1.msra.mxu0 0.0
        %1303 = vmatprep.subr.mxu0 0.0
        %1304 = vmatpush1.msra.mxu0 0.0
        %1305 = vmatprep.subr.mxu0 0.0
        %1306 = vmatpush1.msra.mxu0 0.0
        %1307 = vmatprep.subr.mxu0 0.0
        %1308 = vmatpush1.msra.mxu0 0.0
        %1309 = vmatprep.subr.mxu0 0.0
        %1310 = vmatpush1.msra.mxu0 0.0
        %1311 = vmatprep.subr.mxu0 0.0
        %1312 = vmatpush1.msra.mxu0 0.0
        %1313 = vmatprep.subr.mxu0 0.0
        %1314 = vmatpush1.msra.mxu0 0.0
        %1315 = vmatprep.subr.mxu0 0.0
        %1316 = vmatpush1.msra.mxu0 0.0
        %1317 = vmatprep.subr.mxu0 0.0
        %1318 = vmatpush1.msra.mxu0 0.0
        %1319 = vmatprep.subr.mxu0 0.0
        %1320 = vmatpush1.msra.mxu0 0.0
        %1321 = vmatprep.subr.mxu0 0.0
        %1322 = vmatpush1.msra.mxu0 0.0
        %1323 = vmatprep.subr.mxu0 0.0
        %1324 = vmatpush1.msra.mxu0 0.0
        %1325 = vmatprep.subr.mxu0 0.0
        %1326 = vmatpush1.msra.mxu0 0.0
        %1327 = vmatprep.subr.mxu0 0.0
        %1328 = vmatpush1.msra.mxu0 0.0
        %1329 = vmatprep.subr.mxu0 0.0
        %1330 = vmatpush1.msra.mxu0 %v882
        %1331 = vmatprep.subr.mxu0 0.0
        %1332 = vmatpush1.msra.mxu0 %v881
        %1333 = vmatprep.subr.mxu0 0.0
        %1334 = vmatpush2.msra.mxu0 0.0
        %1335 = vmatprep.subr.mxu0 0.0
        %1336 = vmatpush2.msra.mxu0 0.0
        %1337 = vmatprep.subr.mxu0 0.0
        %1338 = vmatpush2.msra.mxu0 0.0
        %1339 = vmatprep.subr.mxu0 0.0
        %1340 = vmatpush2.msra.mxu0 0.0
        %1341 = vmatprep.subr.mxu0 0.0
        %1342 = vmatpush2.msra.mxu0 0.0
        %1343 = vmatprep.subr.mxu0 0.0
        %1344 = vmatpush2.msra.mxu0 0.0
        %1345 = vmatprep.subr.mxu0 0.0
        %1346 = vmatpush2.msra.mxu0 0.0
        %1347 = vmatprep.subr.mxu0 0.0
        %1348 = vmatpush2.msra.mxu0 0.0
        %1349 = vmatprep.subr.mxu0 0.0
        %1350 = vmatpush2.msra.mxu0 0.0
        %1351 = vmatprep.subr.mxu0 0.0
        %1352 = vmatpush2.msra.mxu0 0.0
        %1353 = vmatprep.subr.mxu0 0.0
        %1354 = vmatpush2.msra.mxu0 0.0
        %1355 = vmatprep.subr.mxu0 0.0
        %1356 = vmatpush2.msra.mxu0 0.0
        %1357 = vmatprep.subr.mxu0 0.0
        %1358 = vmatpush2.msra.mxu0 0.0
        %1359 = vmatprep.subr.mxu0 0.0
        %1360 = vmatpush2.msra.mxu0 0.0
        %1361 = vmatprep.subr.mxu0 0.0
        %1362 = vmatpush2.msra.mxu0 0.0
        %1363 = vmatprep.subr.mxu0 0.0
        %1364 = vmatpush2.msra.mxu0 0.0
        %1365 = vmatprep.mubr.f32.mxu0 0.0
        %1366 = vmatmul.mubr.f32.gmra.mxu0 %v1299
        %v1367 = vpop.f32.mrf.mxu0
        %v1368 = vadd.f32 0.0, %v1367
        %v1369 = vpop.f32.mrf.mxu0
        %1370 = vdwg.mxu0
        %v1371 = vadd.f32 %v1128, %v1368
        %v1372 = vsel %vm637, %v1371, 0.0
        %1373 = vadd.xlane.f32.xlu0 %v1372
        %v1374 = vpop.xlane.xlu0 %1373
        %v1375 = vrcp.pop 32.0
        %v1376 = vmul.f32 %v1374, %v1375
        %v1377 = vsub.f32 %v1371, %v1376
        %v1378 = vmul.f32 %v1377, %v1377
        %v1379 = vsel %vm637, %v1378, 0.0
        %1380 = vadd.xlane.f32.xlu0 %v1379
        %v1381 = vpop.xlane.xlu0 %1380
        %v1382 = vmul.f32 %v1381, %v1375
        %v1383 = vadd.f32 %v1382, 1e-05
        %v1384 = vrsqrt.pop %v1383
        %v1385 = vmul.f32 %v1377, %v1384
        %v1386 = vld [vmem:[%s11] sm:$0x1]
        %v1388 = vlaneseq
        %v1389 = vshrl.u32 %v1388, 7
        %v1390 = vsub.s32 0, %v1389
        %v1391 = vrot.slane %v1386, %v1390
        %v1393 = vmul.f32 %v1385, %v1391
        %v1394 = vld [vmem:[%s12] sm:$0x1]
        %v1396 = vlaneseq
        %v1397 = vshrl.u32 %v1396, 7
        %v1398 = vsub.s32 0, %v1397
        %v1399 = vrot.slane %v1394, %v1398
        %v1401 = vadd.f32 %v1393, %v1399
        %1402 = vst.msk [vmem:[%s615] sm:$0xff] %vm637, %v1401
        %s1403 = sand.u32 %s336, 1
        %s1404 = scalar_lea.sflag [#allocation4], %s1403
        %s1405 = sand.u32 %s336, 1
        %s1406 = smul.addr %s1405, 8
        %s1407 = scalar_lea.vmem [#allocation14], %s1406
        %s1408 = sand.u32 %s362, 1
        %s1409 = scalar_lea.sflag [#allocation16], %s1408
        %s1410 = sand.u32 %s362, 1
        %s1411 = smul.addr %s1410, 16
        %s1412 = scalar_lea.vmem [#allocation15], %s1411
        // Predicated region
        $region101: #{tpu_custom_call.1} parent=71 // pred_check
          %p1413 = pneg %p346
        $region102: #{tpu_custom_call.1} parent=71 // pred_check_branch
          %1415 = sbr.rel (%p1413) target = $region104
        $region103: #{tpu_custom_call.1} parent=71 // pred_region
          %s1417 = ssub.s32 128, 128
          %1418 = vsyncadd %s1404, %s1417
          %s1419 = smul.addr %s40, 128
          %s1420 = scalar_lea.hbm %s13, %s1419
          %s1422 = sshll.u32 %s1407, 4
          %s1423 = int_to_ptr.vmem [resolvable:$true] %s1422
          %1425 = dma.vmem_to_hbm [thread:$0]  %s1423, 128, %s1420, %s1404
        $region104: #{tpu_custom_call.1} parent=71 // pred_fallthru
          _
        // Predicated region
        $region105: #{tpu_custom_call.1} parent=71 // pred_check
          %p1426 = pneg %p372
        $region106: #{tpu_custom_call.1} parent=71 // pred_check_branch
          %1428 = sbr.rel (%p1426) target = $region108
        $region107: #{tpu_custom_call.1} parent=71 // pred_region
          %s1430 = ssub.s32 256, 256
          %1431 = vsyncadd %s1409, %s1430
          %s1432 = smul.addr %s40, 128
          %s1433 = scalar_lea.hbm %s14, %s1432
          %s1434 = sshll.u32 %s1412, 4
          %s1435 = int_to_ptr.vmem [resolvable:$true] %s1434
          %1440 = dma.vmem_to_hbm [thread:$0]  %s1435, 256, %s1433, %s1409, 128, 256, 8
        $region108: #{tpu_custom_call.1} parent=71 // pred_fallthru
          _
      $region72: #{tpu_custom_call.1} parent=5 // pred_fallthru
        _
      %p1441 = scmp.le.s32.totalorder 2, %s35
      // Predicated region
      $region109: #{tpu_custom_call.1} parent=5 // pred_check
        %p1442 = pneg %p1441
      $region110: #{tpu_custom_call.1} parent=5 // pred_check_branch
        %1444 = sbr.rel (%p1442) target = $region112
      $region111: #{tpu_custom_call.1} parent=5 // pred_region
        %s1445 = ssub.s32 %s35, 2
        // Predicated region
        $region113: #{tpu_custom_call.1} parent=111 // pred_check
          %p1446 = pneg %p352
        $region114: #{tpu_custom_call.1} parent=111 // pred_check_branch
          %1448 = sbr.rel (%p1446) target = $region116
        $region115: #{tpu_custom_call.1} parent=111 // pred_region
          %s1449 = sand.u32 %s337, 1
          %s1450 = scalar_lea.sflag [#allocation4], %s1449
          %s1451 = sand.u32 %s337, 1
          %s1452 = smul.addr %s1451, 8
          %s1453 = scalar_lea.vmem [#allocation14], %s1452
          %1454 = dma.done %s1450, 128
        $region116: #{tpu_custom_call.1} parent=111 // pred_fallthru
          _
        // Predicated region
        $region117: #{tpu_custom_call.1} parent=111 // pred_check
          %p1455 = pneg %p378
        $region118: #{tpu_custom_call.1} parent=111 // pred_check_branch
          %1457 = sbr.rel (%p1455) target = $region120
        $region119: #{tpu_custom_call.1} parent=111 // pred_region
          %s1458 = sand.u32 %s363, 1
          %s1459 = scalar_lea.sflag [#allocation16], %s1458
          %s1460 = sand.u32 %s363, 1
          %s1461 = smul.addr %s1460, 16
          %s1462 = scalar_lea.vmem [#allocation15], %s1461
          %1463 = dma.done %s1459, 256
        $region120: #{tpu_custom_call.1} parent=111 // pred_fallthru
          _
      $region112: #{tpu_custom_call.1} parent=5 // pred_fallthru
        _
    $region6: #{tpu_custom_call.1} parent=1 // loop_footer
      %s39 = sadd.s32 1, %s35
    $region7: #{tpu_custom_call.1} parent=1 // loop_footer_branch
      %34 = sbr.rel target = $region3
    $region8: #{tpu_custom_call.1} parent=1 // loop_exit
      _
    %1464 = vsyncpa [#allocation3], 1
    %s1465 = scalar_lea.sflag [#allocation3], 1
    %1466 = vsyncpa %s1465, 1
    %1467 = vsyncpa [#allocation6], 1
    %s1468 = scalar_lea.sflag [#allocation6], 1
    %1469 = vsyncpa %s1468, 1
    %1470 = vsyncpa [#allocation9], 1
    %1471 = vsyncpa [#allocation12], 1
    %1472 = vsyncpa [#allocation4], 1
    %s1473 = scalar_lea.sflag [#allocation4], 1
    %1474 = vsyncpa %s1473, 1
    %1475 = vsyncpa [#allocation16], 1
    %s1476 = scalar_lea.sflag [#allocation16], 1
    %1477 = vsyncpa %s1476, 1

</llo_original>
